<compile_context>
chip_gen: v7x
topology: tpu7x:2x2x1
jax: 0.10.0
libtpu: 0.0.40
codegen_flags: <defaults>
</compile_context>

<pallas_src>
import functools
import math

import jax
import jax.numpy as jnp
from jax.experimental import pallas as pl
from jax.experimental.pallas import tpu as pltpu

_MIB = 1024 * 1024


def _prenorm_residual_kernel(x_ref, g_ref, beta_ref, w1_ref, b1_ref,
                             w2_ref, b2_ref, o_ref, *, eps):
    # x_ref: (TN, D)   g/beta/b2: (1, D) f32   b1: (1, H) f32
    # w1: (D, H) bf16  w2: (H, D) bf16
    x = x_ref[...].astype(jnp.float32)                        # (TN, D) f32

    # ---- LayerNorm over the last (lane) axis, fused single-pass stats ----
    mean = jnp.mean(x, axis=-1, keepdims=True)                # (TN, 1)
    ex2 = jnp.mean(x * x, axis=-1, keepdims=True)             # (TN, 1)
    var = jnp.maximum(ex2 - mean * mean, 0.0)
    inv = jax.lax.rsqrt(var + eps)
    xn = (x - mean) * inv * g_ref[...] + beta_ref[...]        # (TN, D) f32

    # ---- fn: Linear -> GELU -> Linear; bf16 operands, f32 accumulation ----
    h = jnp.dot(xn.astype(w1_ref.dtype), w1_ref[...],
                preferred_element_type=jnp.float32) + b1_ref[...]
    h = jax.nn.gelu(h, approximate=True)                      # tanh GELU (EUP)
    y = jnp.dot(h.astype(w2_ref.dtype), w2_ref[...],
                preferred_element_type=jnp.float32) + b2_ref[...]

    # ---- residual (f32), write once per tile in the output dtype ----
    o_ref[...] = (y + x).astype(o_ref.dtype)


def _vmem_limit_bytes():
    """VMEM request: chip capacity minus headroom (compiler scratch / spills)."""
    try:
        cap = pltpu.get_tpu_info().vmem_capacity_bytes
    except Exception:
        cap = 64 * _MIB                       # conservative (v7x-sized) fallback
    return int(min(max(cap - 16 * _MIB, 32 * _MIB), 100 * _MIB))


def _pick_tile_rows(D, H, x_itemsize, w_itemsize, vmem_limit):
    """Largest row tile whose working set fits the VMEM budget (capped at 512)."""
    # Resident params; assume worst case 2 buffers each (if Buffered(1) falls back).
    param_bytes = 2 * (2 * D * H * w_itemsize + (3 * D + H) * 4)
    # Per-row: x tile (2 bufs) + out tile (2 bufs) + f32 hidden (TN,H)
    # + f32 norm/residual temporaries (~2 x (TN,D)).
    per_row = 2 * D * x_itemsize + 2 * D * x_itemsize + 4 * H + 8 * D
    budget = vmem_limit - param_bytes - 8 * _MIB
    t = max(budget // max(per_row, 1), 8)
    t = int(min(t, 512))          # modest tiles on v7x; 512 amortizes grid-step overhead
    return max((t // 8) * 8, 8)


def _make_pallas_call(N, D, H, tn, x_dtype, eps, vmem_limit, single_buffer_params):
    grid = (pl.cdiv(N, tn),)      # partial last tile handled by Pallas (OOB writes dropped)

    if single_buffer_params:
        def pspec(shape):
            # Constant index_map -> fetched once; no need for double buffering.
            return pl.BlockSpec(shape, lambda i: (0, 0), pipeline_mode=pl.Buffered(1))
    else:
        def pspec(shape):
            return pl.BlockSpec(shape, lambda i: (0, 0))

    kernel = functools.partial(_prenorm_residual_kernel, eps=eps)
    return pl.pallas_call(
        kernel,
        out_shape=jax.ShapeDtypeStruct((N, D), x_dtype),
        grid_spec=pltpu.PrefetchScalarGridSpec(
            num_scalar_prefetch=0,
            grid=grid,
            in_specs=[
                pl.BlockSpec((tn, D), lambda i: (i, 0)),   # x: tiled over rows
                pspec((1, D)),                             # gamma (resident)
                pspec((1, D)),                             # beta
                pspec((D, H)),                             # w1 (bf16)
                pspec((1, H)),                             # b1
                pspec((H, D)),                             # w2 (bf16)
                pspec((1, D)),                             # b2
            ],
            out_specs=pl.BlockSpec((tn, D), lambda i: (i, 0)),
        ),
        compiler_params=pltpu.CompilerParams(
            dimension_semantics=("parallel",),             # shards row tiles across v7x TCs
            vmem_limit_bytes=vmem_limit,
        ),
    )


def pre_norm_residual_forward(x, params, *, eps=1e-5, tile_rows=None):
    """y = fn(LayerNorm(x)) + x with fn = Linear(D,H) -> GELU -> Linear(H,D).

    params = (gamma (D,), beta (D,), w1 (D,H), b1 (H,), w2 (H,D), b2 (D,)).
    x: (..., D). Output dtype == x.dtype. D (and H) should ideally be
    multiples of 128 for lane-dense layout; any D is still correct.
    """
    gamma, beta, w1, b1, w2, b2 = params
    orig_shape = x.shape
    D = orig_shape[-1]
    H = w1.shape[1]
    assert w1.shape == (D, H) and w2.shape == (H, D)

    x2 = x.reshape(-1, D)                     # no dtype cast, no pad (no extra HBM pass)
    N = x2.shape[0]

    w_dtype = jnp.bfloat16                    # MXU-native; f32 accumulation in-kernel
    w1c = w1.astype(w_dtype)
    w2c = w2.astype(w_dtype)
    gamma2 = gamma.reshape(1, D).astype(jnp.float32)
    beta2 = beta.reshape(1, D).astype(jnp.float32)
    b1f = b1.reshape(1, H).astype(jnp.float32)
    b2f = b2.reshape(1, D).astype(jnp.float32)

    vmem_limit = _vmem_limit_bytes()
    if tile_rows is None:
        tile_rows = _pick_tile_rows(D, H, jnp.dtype(x.dtype).itemsize,
                                    jnp.dtype(w_dtype).itemsize, vmem_limit)
    assert tile_rows % 8 == 0
    tn = N if N <= tile_rows else tile_rows

    args = (x2, gamma2, beta2, w1c, b1f, w2c, b2f)
    try:
        out = _make_pallas_call(N, D, H, tn, x.dtype, eps, vmem_limit, True)(*args)
    except Exception:
        # pipeline_mode=pl.Buffered(1) unsupported here: fall back to default buffering.
        out = _make_pallas_call(N, D, H, tn, x.dtype, eps, vmem_limit, False)(*args)

    return out.reshape(orig_shape)


def init_params(key, dim, hidden):
    """LayerNorm-ish (random gamma/beta for a stronger test) + nn.Linear init."""
    kg, kb, kw1, kb1, kw2, kb2 = jax.random.split(key, 6)
    gamma = 1.0 + 0.1 * jax.random.normal(kg, (dim,), jnp.float32)
    beta = 0.1 * jax.random.normal(kb, (dim,), jnp.float32)
    bound1 = 1.0 / math.sqrt(dim)
    w1 = jax.random.uniform(kw1, (dim, hidden), jnp.float32, -bound1, bound1)
    b1 = jax.random.uniform(kb1, (hidden,), jnp.float32, -bound1, bound1)
    bound2 = 1.0 / math.sqrt(hidden)
    w2 = jax.random.uniform(kw2, (hidden, dim), jnp.float32, -bound2, bound2)
    b2 = jax.random.uniform(kb2, (dim,), jnp.float32, -bound2, bound2)
    return (gamma, beta, w1, b1, w2, b2)


def reference_forward(x, params, eps=1e-5):
    """Pure-JAX reference mirroring the kernel math (bf16 matmuls, f32 accum)."""
    gamma, beta, w1, b1, w2, b2 = params
    xf = x.astype(jnp.float32)
    mean = jnp.mean(xf, axis=-1, keepdims=True)
    var = jnp.mean((xf - mean) ** 2, axis=-1, keepdims=True)
    xn = (xf - mean) * jax.lax.rsqrt(var + eps) * gamma + beta
    h = jnp.dot(xn.astype(jnp.bfloat16), w1.astype(jnp.bfloat16),
                preferred_element_type=jnp.float32) + b1
    h = jax.nn.gelu(h, approximate=True)
    y = jnp.dot(h.astype(jnp.bfloat16), w2.astype(jnp.bfloat16),
                preferred_element_type=jnp.float32) + b2
    return (y + xf).astype(x.dtype)


if __name__ == "__main__":
    key = jax.random.PRNGKey(0)
    k_params, k_x = jax.random.split(key)

    # Small but lane-dense shapes: D, H multiples of 128.
    B, S, D, H = 2, 40, 128, 256          # N = 80 rows
    params = init_params(k_params, D, H)
    x = jax.random.normal(k_x, (B, S, D), jnp.float32)

    # 1) f32 input, multi-tile grid with a partial last block (80 = 32+32+16).
    y = jax.block_until_ready(pre_norm_residual_forward(x, params, tile_rows=32))
    y_ref = reference_forward(x, params)
    assert y.shape == x.shape and y.dtype == x.dtype
    assert jnp.allclose(y, y_ref, atol=1e-2, rtol=1e-2), (
        float(jnp.max(jnp.abs(y - y_ref)))
    )

    # 2) bf16 input, auto tile size; output dtype must be preserved.
    xb = x.astype(jnp.bfloat16)
    yb = jax.block_until_ready(pre_norm_residual_forward(xb, params))
    yb_ref = reference_forward(xb, params)
    assert yb.shape == xb.shape and yb.dtype == jnp.bfloat16
    assert jnp.allclose(yb.astype(jnp.float32), yb_ref.astype(jnp.float32),
                        atol=1e-1, rtol=1e-1), (
        float(jnp.max(jnp.abs(yb.astype(jnp.float32) - yb_ref.astype(jnp.float32))))
    )

    print("KERNEL_OK")
</pallas_src>

<mosaic_0001>
module attributes {stable_mosaic.version = 11 : i64} {
  func.func @_prenorm_residual_kernel(%arg0: i32, %arg1: memref<32x128xf32, #tpu.memory_space<vmem>>, %arg2: memref<1x128xf32, #tpu.memory_space<vmem>>, %arg3: memref<1x128xf32, #tpu.memory_space<vmem>>, %arg4: memref<128x256xbf16, #tpu.memory_space<vmem>>, %arg5: memref<1x256xf32, #tpu.memory_space<vmem>>, %arg6: memref<256x128xbf16, #tpu.memory_space<vmem>>, %arg7: memref<1x128xf32, #tpu.memory_space<vmem>>, %arg8: memref<32x128xf32, #tpu.memory_space<vmem>>) attributes {dimension_semantics = [#tpu.dimension_semantics<parallel>], iteration_bounds = array<i64: 3>, scalar_prefetch = 0 : i64, scratch_operands = 0 : i64, tpu.core_type = #tpu.core_type<tc>, window_params = [{transform_indices = @transform_0, window_bounds = array<i64: 32, 128>}, {pipeline_mode = #tpu.pipeline_mode<synchronous>, transform_indices = @transform_1, window_bounds = array<i64: 1, 128>}, {pipeline_mode = #tpu.pipeline_mode<synchronous>, transform_indices = @transform_2, window_bounds = array<i64: 1, 128>}, {pipeline_mode = #tpu.pipeline_mode<synchronous>, transform_indices = @transform_3, window_bounds = array<i64: 128, 256>}, {pipeline_mode = #tpu.pipeline_mode<synchronous>, transform_indices = @transform_4, window_bounds = array<i64: 1, 256>}, {pipeline_mode = #tpu.pipeline_mode<synchronous>, transform_indices = @transform_5, window_bounds = array<i64: 256, 128>}, {pipeline_mode = #tpu.pipeline_mode<synchronous>, transform_indices = @transform_6, window_bounds = array<i64: 1, 128>}, {transform_indices = @transform_7, window_bounds = array<i64: 32, 128>}]} {
    %c0 = arith.constant 0 : index
    %c0_0 = arith.constant 0 : index
    %0 = vector.load %arg1[%c0, %c0_0] : memref<32x128xf32, #tpu.memory_space<vmem>>, vector<32x128xf32>
    %cst = arith.constant dense<0.000000e+00> : vector<32xf32>
    %1 = vector.multi_reduction <add>, %0, %cst [1] : vector<32x128xf32> to vector<32xf32>
    %2 = vector.shape_cast %1 : vector<32xf32> to vector<32x1xf32>
    %cst_1 = arith.constant 1.280000e+02 : f32
    %3 = vector.broadcast %cst_1 : f32 to vector<32x1xf32>
    %4 = arith.divf %2, %3 : vector<32x1xf32>
    %5 = arith.mulf %0, %0 : vector<32x128xf32>
    %cst_2 = arith.constant dense<0.000000e+00> : vector<32xf32>
    %6 = vector.multi_reduction <add>, %5, %cst_2 [1] : vector<32x128xf32> to vector<32xf32>
    %7 = vector.shape_cast %6 : vector<32xf32> to vector<32x1xf32>
    %cst_3 = arith.constant 1.280000e+02 : f32
    %8 = vector.broadcast %cst_3 : f32 to vector<32x1xf32>
    %9 = arith.divf %7, %8 : vector<32x1xf32>
    %10 = arith.mulf %4, %4 : vector<32x1xf32>
    %11 = arith.subf %9, %10 : vector<32x1xf32>
    %cst_4 = arith.constant 0.000000e+00 : f32
    %12 = vector.broadcast %cst_4 : f32 to vector<32x1xf32>
    %13 = arith.maximumf %11, %12 : vector<32x1xf32>
    %cst_5 = arith.constant 9.99999974E-6 : f32
    %14 = vector.broadcast %cst_5 : f32 to vector<32x1xf32>
    %15 = arith.addf %13, %14 : vector<32x1xf32>
    %16 = math.rsqrt %15 : vector<32x1xf32>
    %17 = vector.broadcast %4 : vector<32x1xf32> to vector<32x128xf32>
    %18 = arith.subf %0, %17 : vector<32x128xf32>
    %19 = vector.broadcast %16 : vector<32x1xf32> to vector<32x128xf32>
    %20 = arith.mulf %18, %19 : vector<32x128xf32>
    %c0_6 = arith.constant 0 : index
    %c0_7 = arith.constant 0 : index
    %21 = vector.load %arg2[%c0_6, %c0_7] : memref<1x128xf32, #tpu.memory_space<vmem>>, vector<1x128xf32>
    %22 = vector.broadcast %21 : vector<1x128xf32> to vector<32x128xf32>
    %23 = arith.mulf %20, %22 : vector<32x128xf32>
    %c0_8 = arith.constant 0 : index
    %c0_9 = arith.constant 0 : index
    %24 = vector.load %arg3[%c0_8, %c0_9] : memref<1x128xf32, #tpu.memory_space<vmem>>, vector<1x128xf32>
    %25 = vector.broadcast %24 : vector<1x128xf32> to vector<32x128xf32>
    %26 = arith.addf %23, %25 : vector<32x128xf32>
    %27 = arith.truncf %26 : vector<32x128xf32> to vector<32x128xbf16>
    %c0_10 = arith.constant 0 : index
    %c0_11 = arith.constant 0 : index
    %28 = vector.load %arg4[%c0_10, %c0_11] : memref<128x256xbf16, #tpu.memory_space<vmem>>, vector<128x256xbf16>
    %cst_12 = arith.constant dense<0.000000e+00> : vector<32x256xf32>
    %29 = tpu.matmul %27, %28, %cst_12 {dimension_numbers = #tpu.dot_dimension_numbers<[1], [0], [0], [1], [0, 0, 1, 1], [], []>} : vector<32x128xbf16>, vector<128x256xbf16>, vector<32x256xf32> -> vector<32x256xf32>
    %c0_13 = arith.constant 0 : index
    %c0_14 = arith.constant 0 : index
    %30 = vector.load %arg5[%c0_13, %c0_14] : memref<1x256xf32, #tpu.memory_space<vmem>>, vector<1x256xf32>
    %31 = vector.broadcast %30 : vector<1x256xf32> to vector<32x256xf32>
    %32 = arith.addf %29, %31 : vector<32x256xf32>
    %33 = arith.mulf %32, %32 : vector<32x256xf32>
    %34 = arith.mulf %32, %33 : vector<32x256xf32>
    %cst_15 = arith.constant 4.471500e-02 : f32
    %35 = vector.broadcast %cst_15 : f32 to vector<32x256xf32>
    %36 = arith.mulf %35, %34 : vector<32x256xf32>
    %37 = arith.addf %32, %36 : vector<32x256xf32>
    %cst_16 = arith.constant 0.797884583 : f32
    %38 = vector.broadcast %cst_16 : f32 to vector<32x256xf32>
    %39 = arith.mulf %38, %37 : vector<32x256xf32>
    %40 = math.tanh %39 : vector<32x256xf32>
    %cst_17 = arith.constant 1.000000e+00 : f32
    %41 = vector.broadcast %cst_17 : f32 to vector<32x256xf32>
    %42 = arith.addf %41, %40 : vector<32x256xf32>
    %cst_18 = arith.constant 5.000000e-01 : f32
    %43 = vector.broadcast %cst_18 : f32 to vector<32x256xf32>
    %44 = arith.mulf %43, %42 : vector<32x256xf32>
    %45 = arith.mulf %32, %44 : vector<32x256xf32>
    %46 = arith.truncf %45 : vector<32x256xf32> to vector<32x256xbf16>
    %c0_19 = arith.constant 0 : index
    %c0_20 = arith.constant 0 : index
    %47 = vector.load %arg6[%c0_19, %c0_20] : memref<256x128xbf16, #tpu.memory_space<vmem>>, vector<256x128xbf16>
    %cst_21 = arith.constant dense<0.000000e+00> : vector<32x128xf32>
    %48 = tpu.matmul %46, %47, %cst_21 {dimension_numbers = #tpu.dot_dimension_numbers<[1], [0], [0], [1], [0, 0, 1, 1], [], []>} : vector<32x256xbf16>, vector<256x128xbf16>, vector<32x128xf32> -> vector<32x128xf32>
    %c0_22 = arith.constant 0 : index
    %c0_23 = arith.constant 0 : index
    %49 = vector.load %arg7[%c0_22, %c0_23] : memref<1x128xf32, #tpu.memory_space<vmem>>, vector<1x128xf32>
    %50 = vector.broadcast %49 : vector<1x128xf32> to vector<32x128xf32>
    %51 = arith.addf %48, %50 : vector<32x128xf32>
    %52 = arith.addf %51, %0 : vector<32x128xf32>
    %c0_24 = arith.constant 0 : index
    %c0_25 = arith.constant 0 : index
    %53 = vector.load %arg8[%c0_24, %c0_25] : memref<32x128xf32, #tpu.memory_space<vmem>>, vector<32x128xf32>
    tpu.vector_store %arg8[%c0_24, %c0_25], %52 {strides = array<i32>} : memref<32x128xf32, #tpu.memory_space<vmem>>, vector<32x128xf32>,
    return
  }
  func.func @transform_0(%arg0: i32) -> (i32, i32) {
    %c0_i32 = arith.constant 0 : i32
    %c0_i32_0 = arith.constant 0 : i32
    return %arg0, %c0_i32 : i32, i32
  }
  func.func @transform_1(%arg0: i32) -> (i32, i32) {
    %c0_i32 = arith.constant 0 : i32
    %c0_i32_0 = arith.constant 0 : i32
    %c0_i32_1 = arith.constant 0 : i32
    return %c0_i32, %c0_i32_0 : i32, i32
  }
  func.func @transform_2(%arg0: i32) -> (i32, i32) {
    %c0_i32 = arith.constant 0 : i32
    %c0_i32_0 = arith.constant 0 : i32
    %c0_i32_1 = arith.constant 0 : i32
    return %c0_i32, %c0_i32_0 : i32, i32
  }
  func.func @transform_3(%arg0: i32) -> (i32, i32) {
    %c0_i32 = arith.constant 0 : i32
    %c0_i32_0 = arith.constant 0 : i32
    %c0_i32_1 = arith.constant 0 : i32
    return %c0_i32, %c0_i32_0 : i32, i32
  }
  func.func @transform_4(%arg0: i32) -> (i32, i32) {
    %c0_i32 = arith.constant 0 : i32
    %c0_i32_0 = arith.constant 0 : i32
    %c0_i32_1 = arith.constant 0 : i32
    return %c0_i32, %c0_i32_0 : i32, i32
  }
  func.func @transform_5(%arg0: i32) -> (i32, i32) {
    %c0_i32 = arith.constant 0 : i32
    %c0_i32_0 = arith.constant 0 : i32
    %c0_i32_1 = arith.constant 0 : i32
    return %c0_i32, %c0_i32_0 : i32, i32
  }
  func.func @transform_6(%arg0: i32) -> (i32, i32) {
    %c0_i32 = arith.constant 0 : i32
    %c0_i32_0 = arith.constant 0 : i32
    %c0_i32_1 = arith.constant 0 : i32
    return %c0_i32, %c0_i32_0 : i32, i32
  }
  func.func @transform_7(%arg0: i32) -> (i32, i32) {
    %c0_i32 = arith.constant 0 : i32
    %c0_i32_0 = arith.constant 0 : i32
    return %arg0, %c0_i32 : i32, i32
  }
}

module attributes {stable_mosaic.version = 11 : i64} {
  func.func @_prenorm_residual_kernel(%arg0: i32, %arg1: memref<32x128xf32, #tpu.memory_space<vmem>>, %arg2: memref<1x128xf32, #tpu.memory_space<vmem>>, %arg3: memref<1x128xf32, #tpu.memory_space<vmem>>, %arg4: memref<128x256xbf16, #tpu.memory_space<vmem>>, %arg5: memref<1x256xf32, #tpu.memory_space<vmem>>, %arg6: memref<256x128xbf16, #tpu.memory_space<vmem>>, %arg7: memref<1x128xf32, #tpu.memory_space<vmem>>, %arg8: memref<32x128xf32, #tpu.memory_space<vmem>>) attributes {dimension_semantics = [#tpu.dimension_semantics<parallel>], iteration_bounds = array<i64: 3>, scalar_prefetch = 0 : i64, scratch_operands = 0 : i64, tpu.core_type = #tpu.core_type<tc>, window_params = [{transform_indices = @transform_0, window_bounds = array<i64: 32, 128>}, {pipeline_mode = #tpu.pipeline_mode<synchronous>, transform_indices = @transform_1, window_bounds = array<i64: 1, 128>}, {pipeline_mode = #tpu.pipeline_mode<synchronous>, transform_indices = @transform_2, window_bounds = array<i64: 1, 128>}, {pipeline_mode = #tpu.pipeline_mode<synchronous>, transform_indices = @transform_3, window_bounds = array<i64: 128, 256>}, {pipeline_mode = #tpu.pipeline_mode<synchronous>, transform_indices = @transform_4, window_bounds = array<i64: 1, 256>}, {pipeline_mode = #tpu.pipeline_mode<synchronous>, transform_indices = @transform_5, window_bounds = array<i64: 256, 128>}, {pipeline_mode = #tpu.pipeline_mode<synchronous>, transform_indices = @transform_6, window_bounds = array<i64: 1, 128>}, {transform_indices = @transform_7, window_bounds = array<i64: 32, 128>}]} {
    %c0 = arith.constant 0 : index
    %c0_0 = arith.constant 0 : index
    %0 = vector.load %arg1[%c0, %c0_0] : memref<32x128xf32, #tpu.memory_space<vmem>>, vector<32x128xf32>
    %cst = arith.constant dense<0.000000e+00> : vector<32xf32>
    %1 = vector.multi_reduction <add>, %0, %cst [1] : vector<32x128xf32> to vector<32xf32>
    %2 = vector.shape_cast %1 : vector<32xf32> to vector<32x1xf32>
    %cst_1 = arith.constant 1.280000e+02 : f32
    %3 = vector.broadcast %cst_1 : f32 to vector<32x1xf32>
    %4 = arith.divf %2, %3 : vector<32x1xf32>
    %5 = arith.mulf %0, %0 : vector<32x128xf32>
    %cst_2 = arith.constant dense<0.000000e+00> : vector<32xf32>
    %6 = vector.multi_reduction <add>, %5, %cst_2 [1] : vector<32x128xf32> to vector<32xf32>
    %7 = vector.shape_cast %6 : vector<32xf32> to vector<32x1xf32>
    %cst_3 = arith.constant 1.280000e+02 : f32
    %8 = vector.broadcast %cst_3 : f32 to vector<32x1xf32>
    %9 = arith.divf %7, %8 : vector<32x1xf32>
    %10 = arith.mulf %4, %4 : vector<32x1xf32>
    %11 = arith.subf %9, %10 : vector<32x1xf32>
    %cst_4 = arith.constant 0.000000e+00 : f32
    %12 = vector.broadcast %cst_4 : f32 to vector<32x1xf32>
    %13 = arith.maximumf %11, %12 : vector<32x1xf32>
    %cst_5 = arith.constant 9.99999974E-6 : f32
    %14 = vector.broadcast %cst_5 : f32 to vector<32x1xf32>
    %15 = arith.addf %13, %14 : vector<32x1xf32>
    %16 = math.rsqrt %15 : vector<32x1xf32>
    %17 = vector.broadcast %4 : vector<32x1xf32> to vector<32x128xf32>
    %18 = arith.subf %0, %17 : vector<32x128xf32>
    %19 = vector.broadcast %16 : vector<32x1xf32> to vector<32x128xf32>
    %20 = arith.mulf %18, %19 : vector<32x128xf32>
    %c0_6 = arith.constant 0 : index
    %c0_7 = arith.constant 0 : index
    %21 = vector.load %arg2[%c0_6, %c0_7] : memref<1x128xf32, #tpu.memory_space<vmem>>, vector<1x128xf32>
    %22 = vector.broadcast %21 : vector<1x128xf32> to vector<32x128xf32>
    %23 = arith.mulf %20, %22 : vector<32x128xf32>
    %c0_8 = arith.constant 0 : index
    %c0_9 = arith.constant 0 : index
    %24 = vector.load %arg3[%c0_8, %c0_9] : memref<1x128xf32, #tpu.memory_space<vmem>>, vector<1x128xf32>
    %25 = vector.broadcast %24 : vector<1x128xf32> to vector<32x128xf32>
    %26 = arith.addf %23, %25 : vector<32x128xf32>
    %27 = arith.truncf %26 : vector<32x128xf32> to vector<32x128xbf16>
    %c0_10 = arith.constant 0 : index
    %c0_11 = arith.constant 0 : index
    %28 = vector.load %arg4[%c0_10, %c0_11] : memref<128x256xbf16, #tpu.memory_space<vmem>>, vector<128x256xbf16>
    %cst_12 = arith.constant dense<0.000000e+00> : vector<32x256xf32>
    %29 = tpu.matmul %27, %28, %cst_12 {dimension_numbers = #tpu.dot_dimension_numbers<[1], [0], [0], [1], [0, 0, 1, 1], [], []>} : vector<32x128xbf16>, vector<128x256xbf16>, vector<32x256xf32> -> vector<32x256xf32>
    %c0_13 = arith.constant 0 : index
    %c0_14 = arith.constant 0 : index
    %30 = vector.load %arg5[%c0_13, %c0_14] : memref<1x256xf32, #tpu.memory_space<vmem>>, vector<1x256xf32>
    %31 = vector.broadcast %30 : vector<1x256xf32> to vector<32x256xf32>
    %32 = arith.addf %29, %31 : vector<32x256xf32>
    %33 = arith.mulf %32, %32 : vector<32x256xf32>
    %34 = arith.mulf %32, %33 : vector<32x256xf32>
    %cst_15 = arith.constant 4.471500e-02 : f32
    %35 = vector.broadcast %cst_15 : f32 to vector<32x256xf32>
    %36 = arith.mulf %35, %34 : vector<32x256xf32>
    %37 = arith.addf %32, %36 : vector<32x256xf32>
    %cst_16 = arith.constant 0.797884583 : f32
    %38 = vector.broadcast %cst_16 : f32 to vector<32x256xf32>
    %39 = arith.mulf %38, %37 : vector<32x256xf32>
    %40 = math.tanh %39 : vector<32x256xf32>
    %cst_17 = arith.constant 1.000000e+00 : f32
    %41 = vector.broadcast %cst_17 : f32 to vector<32x256xf32>
    %42 = arith.addf %41, %40 : vector<32x256xf32>
    %cst_18 = arith.constant 5.000000e-01 : f32
    %43 = vector.broadcast %cst_18 : f32 to vector<32x256xf32>
    %44 = arith.mulf %43, %42 : vector<32x256xf32>
    %45 = arith.mulf %32, %44 : vector<32x256xf32>
    %46 = arith.truncf %45 : vector<32x256xf32> to vector<32x256xbf16>
    %c0_19 = arith.constant 0 : index
    %c0_20 = arith.constant 0 : index
    %47 = vector.load %arg6[%c0_19, %c0_20] : memref<256x128xbf16, #tpu.memory_space<vmem>>, vector<256x128xbf16>
    %cst_21 = arith.constant dense<0.000000e+00> : vector<32x128xf32>
    %48 = tpu.matmul %46, %47, %cst_21 {dimension_numbers = #tpu.dot_dimension_numbers<[1], [0], [0], [1], [0, 0, 1, 1], [], []>} : vector<32x256xbf16>, vector<256x128xbf16>, vector<32x128xf32> -> vector<32x128xf32>
    %c0_22 = arith.constant 0 : index
    %c0_23 = arith.constant 0 : index
    %49 = vector.load %arg7[%c0_22, %c0_23] : memref<1x128xf32, #tpu.memory_space<vmem>>, vector<1x128xf32>
    %50 = vector.broadcast %49 : vector<1x128xf32> to vector<32x128xf32>
    %51 = arith.addf %48, %50 : vector<32x128xf32>
    %52 = arith.addf %51, %0 : vector<32x128xf32>
    %c0_24 = arith.constant 0 : index
    %c0_25 = arith.constant 0 : index
    %53 = vector.load %arg8[%c0_24, %c0_25] : memref<32x128xf32, #tpu.memory_space<vmem>>, vector<32x128xf32>
    tpu.vector_store %arg8[%c0_24, %c0_25], %52 {strides = array<i32>} : memref<32x128xf32, #tpu.memory_space<vmem>>, vector<32x128xf32>,
    return
  }
  func.func @transform_0(%arg0: i32) -> (i32, i32) {
    %c0_i32 = arith.constant 0 : i32
    %c0_i32_0 = arith.constant 0 : i32
    return %arg0, %c0_i32 : i32, i32
  }
  func.func @transform_1(%arg0: i32) -> (i32, i32) {
    %c0_i32 = arith.constant 0 : i32
    %c0_i32_0 = arith.constant 0 : i32
    %c0_i32_1 = arith.constant 0 : i32
    return %c0_i32, %c0_i32_0 : i32, i32
  }
  func.func @transform_2(%arg0: i32) -> (i32, i32) {
    %c0_i32 = arith.constant 0 : i32
    %c0_i32_0 = arith.constant 0 : i32
    %c0_i32_1 = arith.constant 0 : i32
    return %c0_i32, %c0_i32_0 : i32, i32
  }
  func.func @transform_3(%arg0: i32) -> (i32, i32) {
    %c0_i32 = arith.constant 0 : i32
    %c0_i32_0 = arith.constant 0 : i32
    %c0_i32_1 = arith.constant 0 : i32
    return %c0_i32, %c0_i32_0 : i32, i32
  }
  func.func @transform_4(%arg0: i32) -> (i32, i32) {
    %c0_i32 = arith.constant 0 : i32
    %c0_i32_0 = arith.constant 0 : i32
    %c0_i32_1 = arith.constant 0 : i32
    return %c0_i32, %c0_i32_0 : i32, i32
  }
  func.func @transform_5(%arg0: i32) -> (i32, i32) {
    %c0_i32 = arith.constant 0 : i32
    %c0_i32_0 = arith.constant 0 : i32
    %c0_i32_1 = arith.constant 0 : i32
    return %c0_i32, %c0_i32_0 : i32, i32
  }
  func.func @transform_6(%arg0: i32) -> (i32, i32) {
    %c0_i32 = arith.constant 0 : i32
    %c0_i32_0 = arith.constant 0 : i32
    %c0_i32_1 = arith.constant 0 : i32
    return %c0_i32, %c0_i32_0 : i32, i32
  }
  func.func @transform_7(%arg0: i32) -> (i32, i32) {
    %c0_i32 = arith.constant 0 : i32
    %c0_i32_0 = arith.constant 0 : i32
    return %arg0, %c0_i32 : i32, i32
  }
}

</mosaic_0001>

<llo_original>
// kernel: tpu_custom_call.1
$region0: #{tpu_custom_call.1}
  #allocation0 [shape = 'u32[]', space=smem, size = 0x4, offset = 0x4, fixed_abs, tag = 'smem constant byte address 0x4 - core index']
  #allocation1 [shape = 'u32[144,128]{1,0:T(1,128)}', space=vmem, size = 0x12000, scoped, tag = 'internal scratch']
  %s0 = inlined_call_operand.hbm [shape: f32[80,128], index: 0, kind: input, shape index: {}]
  %s1 = inlined_call_operand.vmem [shape: f32[1,128], index: 1, kind: input, shape index: {}]
  %s2 = inlined_call_operand.vmem [shape: f32[1,128], index: 2, kind: input, shape index: {}]
  %s3 = inlined_call_operand.hbm [shape: bf16[128,256], index: 3, kind: input, shape index: {}]
  %s4 = inlined_call_operand.vmem [shape: f32[1,256], index: 4, kind: input, shape index: {}]
  %s5 = inlined_call_operand.hbm [shape: bf16[256,128], index: 5, kind: input, shape index: {}]
  %s6 = inlined_call_operand.vmem [shape: f32[1,128], index: 6, kind: input, shape index: {}]
  %s7 = inlined_call_operand.hbm [shape: f32[80,128], index: 7, kind: output, shape index: {}]
  %s8 = sld [smem:[#allocation0]]
  $region73: #{tpu_custom_call.1} parent=0
    _
  %s10 = ssub.s32 1, %s8
  %s11 = scalar_select 0, %s10, %s8
  $region1: #{tpu_custom_call.1} parent=0
    #allocation2 [shape = 'u8[32768]{0}', space=vmem, size = 0x8000, scoped, tag = 'input window, operand 0']
    #allocation3 [shape = 's32[2]{0}', space=sflag, size = 0x8, scoped, tag = 'scoped memory for tpu_custom_call.1']
    #allocation4 [shape = 's32[2]{0}', space=sflag, size = 0x8, scoped, tag = 'scoped memory for tpu_custom_call.1']
    #allocation5 [shape = 'u8[65536]{0}', space=vmem, size = 0x10000, scoped, tag = 'input window, operand 3, single buffered']
    #allocation6 [shape = 's32[1]{0}', space=sflag, size = 0x4, scoped, tag = 'scoped memory for tpu_custom_call.1']
    #allocation7 [shape = 'u8[65536]{0}', space=vmem, size = 0x10000, scoped, tag = 'input window, operand 5, single buffered']
    #allocation8 [shape = 'u8[32768]{0}', space=vmem, size = 0x8000, scoped, tag = 'output window, operand 0']
    %12 = vsyncpa [#allocation3], 0
    %s13 = scalar_lea.sflag [#allocation3], 1
    %14 = vsyncpa %s13, 0
    %15 = vsyncpa [#allocation6], 0
    %16 = vsyncpa [#allocation4], 0
    %s17 = scalar_lea.sflag [#allocation4], 1
    %18 = vsyncpa %s17, 0
    loop: start=0, step=1, limit=5
    $region2: #{tpu_custom_call.1} parent=1 // loop_pre_header
      _
    $region3: #{tpu_custom_call.1} parent=1 // loop_header
      %s20 = sphi 0, %s24
      %p21 = scmp.ge.s32.totalorder %s20, 5
      %s30 = sphi 0, %s32
      %s33 = sphi 0, %s30
      %s34 = sphi 0, %s33
      %s50 = sphi 0, %s34
      %s54 = sphi 0, %s54
      %s56 = sphi 0, %s54
      %s57 = sphi 0, %s56
      %s71 = sphi 0, %s57
      %s75 = sphi 0, %s75
      %s77 = sphi 0, %s75
      %s78 = sphi 0, %s77
      %s92 = sphi 0, %s78
      %s96 = sphi 0, %s96
      %s98 = sphi 0, %s96
      %s99 = sphi 0, %s98
      %s113 = sphi 0, %s99
      %s117 = sphi 0, %s117
      %s119 = sphi 0, %s117
      %s120 = sphi 0, %s119
      %s134 = sphi 0, %s120
      %s138 = sphi 0, %s138
      %s140 = sphi 0, %s138
      %s141 = sphi 0, %s140
      %s155 = sphi 0, %s141
      %s159 = sphi 0, %s159
      %s161 = sphi 0, %s159
      %s162 = sphi 0, %s161
      %s176 = sphi 0, %s162
      %s182 = sphi 0, %s184
      %s185 = sphi 0, %s182
      %s186 = sphi 0, %s185
      %s202 = sphi 0, %s186
    $region4: #{tpu_custom_call.1} parent=1 // loop_header_branch
      %23 = sbr.rel (%p21) target = $region8
    $region5: #{tpu_custom_call.1} parent=1 // loop_body
      %s25 = ssub.s32 %s20, 1
      %s26 = ssub.s32 %s20, 2
      %s27 = sadd.s32 %s20, 1
      %s28 = ssub.s32 %s20, %s27
      %p29 = scmp.eq.s32.totalorder %s28, 0
      %s31 = sadd.s32 %s30, 1
      %s32 = scalar_select %p29, %s30, %s31
      %p35 = pneg %p29
      %p36 = scmp.eq.s32.totalorder %s20, 2
      %p37 = por %p35, %p36
      %p38 = scmp.ne.s32.totalorder %s30, %s33
      %p39 = scmp.eq.s32.totalorder %s20, 0
      %p40 = por %p38, %p39
      %p41 = scmp.ne.s32.totalorder %s30, %s33
      %p42 = scmp.eq.s32.totalorder %s25, 2
      %p43 = por %p41, %p42
      %p44 = scmp.ne.s32.totalorder %s33, %s34
      %p45 = scmp.eq.s32.totalorder %s25, 0
      %p46 = por %p44, %p45
      %p47 = scmp.ne.s32.totalorder %s33, %s34
      %p48 = scmp.eq.s32.totalorder %s26, 2
      %p49 = por %p47, %p48
      %p51 = scmp.ne.s32.totalorder %s34, %s50
      %p52 = scmp.eq.s32.totalorder %s26, 0
      %p53 = por %p51, %p52
      %s55 = sadd.s32 %s54, 1
      %p58 = scmp.eq.s32.totalorder %s20, 2
      %p59 = scmp.ne.s32.totalorder %s54, %s56
      %p60 = scmp.eq.s32.totalorder %s20, 0
      %p61 = por %p59, %p60
      %p62 = scmp.ne.s32.totalorder %s54, %s56
      %p63 = scmp.eq.s32.totalorder %s25, 2
      %p64 = por %p62, %p63
      %p65 = scmp.ne.s32.totalorder %s56, %s57
      %p66 = scmp.eq.s32.totalorder %s25, 0
      %p67 = por %p65, %p66
      %p68 = scmp.ne.s32.totalorder %s56, %s57
      %p69 = scmp.eq.s32.totalorder %s26, 2
      %p70 = por %p68, %p69
      %p72 = scmp.ne.s32.totalorder %s57, %s71
      %p73 = scmp.eq.s32.totalorder %s26, 0
      %p74 = por %p72, %p73
      %s76 = sadd.s32 %s75, 1
      %p79 = scmp.eq.s32.totalorder %s20, 2
      %p80 = scmp.ne.s32.totalorder %s75, %s77
      %p81 = scmp.eq.s32.totalorder %s20, 0
      %p82 = por %p80, %p81
      %p83 = scmp.ne.s32.totalorder %s75, %s77
      %p84 = scmp.eq.s32.totalorder %s25, 2
      %p85 = por %p83, %p84
      %p86 = scmp.ne.s32.totalorder %s77, %s78
      %p87 = scmp.eq.s32.totalorder %s25, 0
      %p88 = por %p86, %p87
      %p89 = scmp.ne.s32.totalorder %s77, %s78
      %p90 = scmp.eq.s32.totalorder %s26, 2
      %p91 = por %p89, %p90
      %p93 = scmp.ne.s32.totalorder %s78, %s92
      %p94 = scmp.eq.s32.totalorder %s26, 0
      %p95 = por %p93, %p94
      %s97 = sadd.s32 %s96, 1
      %p100 = scmp.eq.s32.totalorder %s20, 2
      %p101 = scmp.ne.s32.totalorder %s96, %s98
      %p102 = scmp.eq.s32.totalorder %s20, 0
      %p103 = por %p101, %p102
      %p104 = scmp.ne.s32.totalorder %s96, %s98
      %p105 = scmp.eq.s32.totalorder %s25, 2
      %p106 = por %p104, %p105
      %p107 = scmp.ne.s32.totalorder %s98, %s99
      %p108 = scmp.eq.s32.totalorder %s25, 0
      %p109 = por %p107, %p108
      %p110 = scmp.ne.s32.totalorder %s98, %s99
      %p111 = scmp.eq.s32.totalorder %s26, 2
      %p112 = por %p110, %p111
      %p114 = scmp.ne.s32.totalorder %s99, %s113
      %p115 = scmp.eq.s32.totalorder %s26, 0
      %p116 = por %p114, %p115
      %s118 = sadd.s32 %s117, 1
      %p121 = scmp.eq.s32.totalorder %s20, 2
      %p122 = scmp.ne.s32.totalorder %s117, %s119
      %p123 = scmp.eq.s32.totalorder %s20, 0
      %p124 = por %p122, %p123
      %p125 = scmp.ne.s32.totalorder %s117, %s119
      %p126 = scmp.eq.s32.totalorder %s25, 2
      %p127 = por %p125, %p126
      %p128 = scmp.ne.s32.totalorder %s119, %s120
      %p129 = scmp.eq.s32.totalorder %s25, 0
      %p130 = por %p128, %p129
      %p131 = scmp.ne.s32.totalorder %s119, %s120
      %p132 = scmp.eq.s32.totalorder %s26, 2
      %p133 = por %p131, %p132
      %p135 = scmp.ne.s32.totalorder %s120, %s134
      %p136 = scmp.eq.s32.totalorder %s26, 0
      %p137 = por %p135, %p136
      %s139 = sadd.s32 %s138, 1
      %p142 = scmp.eq.s32.totalorder %s20, 2
      %p143 = scmp.ne.s32.totalorder %s138, %s140
      %p144 = scmp.eq.s32.totalorder %s20, 0
      %p145 = por %p143, %p144
      %p146 = scmp.ne.s32.totalorder %s138, %s140
      %p147 = scmp.eq.s32.totalorder %s25, 2
      %p148 = por %p146, %p147
      %p149 = scmp.ne.s32.totalorder %s140, %s141
      %p150 = scmp.eq.s32.totalorder %s25, 0
      %p151 = por %p149, %p150
      %p152 = scmp.ne.s32.totalorder %s140, %s141
      %p153 = scmp.eq.s32.totalorder %s26, 2
      %p154 = por %p152, %p153
      %p156 = scmp.ne.s32.totalorder %s141, %s155
      %p157 = scmp.eq.s32.totalorder %s26, 0
      %p158 = por %p156, %p157
      %s160 = sadd.s32 %s159, 1
      %p163 = scmp.eq.s32.totalorder %s20, 2
      %p164 = scmp.ne.s32.totalorder %s159, %s161
      %p165 = scmp.eq.s32.totalorder %s20, 0
      %p166 = por %p164, %p165
      %p167 = scmp.ne.s32.totalorder %s159, %s161
      %p168 = scmp.eq.s32.totalorder %s25, 2
      %p169 = por %p167, %p168
      %p170 = scmp.ne.s32.totalorder %s161, %s162
      %p171 = scmp.eq.s32.totalorder %s25, 0
      %p172 = por %p170, %p171
      %p173 = scmp.ne.s32.totalorder %s161, %s162
      %p174 = scmp.eq.s32.totalorder %s26, 2
      %p175 = por %p173, %p174
      %p177 = scmp.ne.s32.totalorder %s162, %s176
      %p178 = scmp.eq.s32.totalorder %s26, 0
      %p179 = por %p177, %p178
      %s180 = ssub.s32 %s20, %s27
      %p181 = scmp.eq.s32.totalorder %s180, 0
      %s183 = sadd.s32 %s182, 1
      %s184 = scalar_select %p181, %s182, %s183
      %p187 = pneg %p181
      %p188 = scmp.eq.s32.totalorder %s20, 2
      %p189 = por %p187, %p188
      %p190 = scmp.ne.s32.totalorder %s182, %s185
      %p191 = scmp.eq.s32.totalorder %s20, 0
      %p192 = por %p190, %p191
      %p193 = scmp.ne.s32.totalorder %s182, %s185
      %p194 = scmp.eq.s32.totalorder %s25, 2
      %p195 = por %p193, %p194
      %p196 = scmp.ne.s32.totalorder %s185, %s186
      %p197 = scmp.eq.s32.totalorder %s25, 0
      %p198 = por %p196, %p197
      %p199 = scmp.ne.s32.totalorder %s185, %s186
      %p200 = scmp.eq.s32.totalorder %s26, 2
      %p201 = por %p199, %p200
      %p203 = scmp.ne.s32.totalorder %s186, %s202
      %p204 = scmp.eq.s32.totalorder %s26, 0
      %p205 = por %p203, %p204
      %p206 = scmp.le.s32.totalorder 1, %s20
      %p207 = scmp.lt.s32.totalorder %s20, 4
      %p208 = pnand %p206, %p207
      %p209 = pneg %p208
      // Predicated region
      $region9: #{tpu_custom_call.1} parent=5 // pred_check
        _
      $region10: #{tpu_custom_call.1} parent=5 // pred_check_branch
        %211 = sbr.rel (%p208) target = $region12
      $region11: #{tpu_custom_call.1} parent=5 // pred_region
        %s212 = ssub.s32 %s20, 1
        // Predicated region
        $region13: #{tpu_custom_call.1} parent=11 // pred_check
          %p213 = pneg %p67
        $region14: #{tpu_custom_call.1} parent=11 // pred_check_branch
          %215 = sbr.rel (%p213) target = $region16
        $region15: #{tpu_custom_call.1} parent=11 // pred_region
          _
        $region16: #{tpu_custom_call.1} parent=11 // pred_fallthru
          _
        // Predicated region
        $region17: #{tpu_custom_call.1} parent=11 // pred_check
          %p216 = pneg %p88
        $region18: #{tpu_custom_call.1} parent=11 // pred_check_branch
          %218 = sbr.rel (%p216) target = $region20
        $region19: #{tpu_custom_call.1} parent=11 // pred_region
          _
        $region20: #{tpu_custom_call.1} parent=11 // pred_fallthru
          _
        // Predicated region
        $region21: #{tpu_custom_call.1} parent=11 // pred_check
          %p219 = pneg %p109
        $region22: #{tpu_custom_call.1} parent=11 // pred_check_branch
          %221 = sbr.rel (%p219) target = $region24
        $region23: #{tpu_custom_call.1} parent=11 // pred_region
          %s223 = ssub.s32 2048, 2048
          %224 = vsyncadd [#allocation6], %s223
          %s225 = sshll.u32 [#allocation5], 4
          %s226 = int_to_ptr.vmem [resolvable:$true] %s225
          %231 = dma.hbm_to_vmem [thread:$0]  %s3, 2048, %s226, [#allocation6], 128, 128, 8
        $region24: #{tpu_custom_call.1} parent=11 // pred_fallthru
          _
        // Predicated region
        $region25: #{tpu_custom_call.1} parent=11 // pred_check
          %p232 = pneg %p130
        $region26: #{tpu_custom_call.1} parent=11 // pred_check_branch
          %234 = sbr.rel (%p232) target = $region28
        $region27: #{tpu_custom_call.1} parent=11 // pred_region
          _
        $region28: #{tpu_custom_call.1} parent=11 // pred_fallthru
          _
        // Predicated region
        $region29: #{tpu_custom_call.1} parent=11 // pred_check
          %p235 = pneg %p151
        $region30: #{tpu_custom_call.1} parent=11 // pred_check_branch
          %237 = sbr.rel (%p235) target = $region32
        $region31: #{tpu_custom_call.1} parent=11 // pred_region
          %s239 = ssub.s32 2048, 2048
          %240 = vsyncadd [#allocation6], %s239
          %s241 = sshll.u32 [#allocation7], 4
          %s242 = int_to_ptr.vmem [resolvable:$true] %s241
          %247 = dma.hbm_to_vmem [thread:$0]  %s5, 2048, %s242, [#allocation6], 64, 64, 4
        $region32: #{tpu_custom_call.1} parent=11 // pred_fallthru
          _
        // Predicated region
        $region33: #{tpu_custom_call.1} parent=11 // pred_check
          %p248 = pneg %p172
        $region34: #{tpu_custom_call.1} parent=11 // pred_check_branch
          %250 = sbr.rel (%p248) target = $region36
        $region35: #{tpu_custom_call.1} parent=11 // pred_region
          _
        $region36: #{tpu_custom_call.1} parent=11 // pred_fallthru
          _
      $region12: #{tpu_custom_call.1} parent=5 // pred_fallthru
        _
      %p251 = scmp.lt.s32.totalorder %s20, 3
      // Predicated region
      $region37: #{tpu_custom_call.1} parent=5 // pred_check
        %p252 = pneg %p251
      $region38: #{tpu_custom_call.1} parent=5 // pred_check_branch
        %254 = sbr.rel (%p252) target = $region40
      $region39: #{tpu_custom_call.1} parent=5 // pred_region
        // Predicated region
        $region41: #{tpu_custom_call.1} parent=39 // pred_check
          %p255 = pneg %p40
        $region42: #{tpu_custom_call.1} parent=39 // pred_check_branch
          %257 = sbr.rel (%p255) target = $region44
        $region43: #{tpu_custom_call.1} parent=39 // pred_region
          %s258 = sand.u32 %s30, 1
          %s259 = scalar_lea.sflag [#allocation3], %s258
          %s260 = sand.u32 %s30, 1
          %s261 = smul.addr %s260, 32
          %s262 = scalar_lea.vmem [#allocation2], %s261
          %s263 = smul.u32 4, %s20
          %s264 = ssub.s32 10, %s263
          %p265 = scmp.lt.s32.totalorder %s264, 4
          %s266 = scalar_select %p265, %s264, 4
          %s267 = smul.u32 128, %s266
          %s269 = ssub.s32 512, %s267
          %270 = vsyncadd %s259, %s269
          %p271 = scmp.ne.s32.totalorder 0, %s267
          %s272 = smul.addr %s263, 128
          %s273 = scalar_lea.hbm %s0, %s272
          %s274 = smul.u32 8, %s266
          %s275 = sshll.u32 %s262, 4
          %s276 = int_to_ptr.vmem [resolvable:$true] %s275
          %s277 = sshll.u32 %s274, 4
          %281 = dma.hbm_to_vmem [thread:$0]  (%p271), %s273, %s277, %s276, %s259, 128, 128, 8
        $region44: #{tpu_custom_call.1} parent=39 // pred_fallthru
          _
      $region40: #{tpu_custom_call.1} parent=5 // pred_fallthru
        _
      %p282 = scmp.le.s32.totalorder 1, %s20
      %p283 = scmp.lt.s32.totalorder %s20, 4
      %p284 = pnand %p282, %p283
      %p285 = pneg %p284
      // Predicated region
      $region45: #{tpu_custom_call.1} parent=5 // pred_check
        _
      $region46: #{tpu_custom_call.1} parent=5 // pred_check_branch
        %287 = sbr.rel (%p284) target = $region48
      $region47: #{tpu_custom_call.1} parent=5 // pred_region
        %s288 = ssub.s32 %s20, 1
        %s289 = sand.u32 %s33, 1
        %s290 = scalar_lea.sflag [#allocation3], %s289
        %s291 = sand.u32 %s33, 1
        %s292 = smul.addr %s291, 32
        %s293 = scalar_lea.vmem [#allocation2], %s292
        // Predicated region
        $region49: #{tpu_custom_call.1} parent=47 // pred_check
          %p294 = pneg %p46
        $region50: #{tpu_custom_call.1} parent=47 // pred_check_branch
          %296 = sbr.rel (%p294) target = $region52
        $region51: #{tpu_custom_call.1} parent=47 // pred_region
          %297 = dma.done %s290, 512
        $region52: #{tpu_custom_call.1} parent=47 // pred_fallthru
          _
        // Predicated region
        $region53: #{tpu_custom_call.1} parent=47 // pred_check
          %p298 = pneg %p109
        $region54: #{tpu_custom_call.1} parent=47 // pred_check_branch
          %300 = sbr.rel (%p298) target = $region56
        $region55: #{tpu_custom_call.1} parent=47 // pred_region
          %301 = dma.done [#allocation6], 2048
        $region56: #{tpu_custom_call.1} parent=47 // pred_fallthru
          _
        // Predicated region
        $region57: #{tpu_custom_call.1} parent=47 // pred_check
          %p302 = pneg %p151
        $region58: #{tpu_custom_call.1} parent=47 // pred_check_branch
          %304 = sbr.rel (%p302) target = $region60
        $region59: #{tpu_custom_call.1} parent=47 // pred_region
          %305 = dma.done [#allocation6], 2048
        $region60: #{tpu_custom_call.1} parent=47 // pred_fallthru
          _
        %s306 = sand.u32 %s33, 1
        %s307 = scalar_lea.sflag [#allocation3], %s306
        %s308 = sand.u32 %s33, 1
        %s309 = smul.addr %s308, 32
        %s310 = scalar_lea.vmem [#allocation2], %s309
        %p311 = pneg %p46
        %p312 = pneg %p43
        %p313 = pneg %p67
        %p314 = pneg %p64
        %p315 = pneg %p88
        %p316 = pneg %p85
        %p317 = pneg %p109
        %p318 = pneg %p106
        %p319 = pneg %p130
        %p320 = pneg %p127
        %p321 = pneg %p151
        %p322 = pneg %p148
        %p323 = pneg %p172
        %p324 = pneg %p169
        %p325 = pneg %p198
        %p326 = pneg %p195
        %s327 = sand.u32 %s185, 1
        %s328 = scalar_lea.sflag [#allocation4], %s327
        %s329 = sand.u32 %s185, 1
        %s330 = smul.addr %s329, 32
        %s331 = scalar_lea.vmem [#allocation8], %s330
        %s332 = smul.u32 4, %s25
        %s333 = ssub.s32 10, %s332
        %p334 = scmp.lt.s32.totalorder %s333, 4
        %s335 = scalar_select %p334, %s333, 4
        %s336 = smul.u32 128, %s335
        %s337 = smul.u32 4, %s25
        %s338 = ssub.s32 10, %s337
        %p339 = scmp.lt.s32.totalorder %s338, 4
        %s340 = scalar_select %p339, %s338, 4
        %s341 = smul.u32 128, %s340
        %v343 = vld [vmem:[%s293] sm:$0xff]
        %v344 = vld [vmem:[%s293 + $0x8] sm:$0xff]
        %v345 = vld [vmem:[%s293 + $0x10] sm:$0xff]
        %v346 = vld [vmem:[%s293 + $0x18] sm:$0xff]
        %347 = vadd.xlane.f32.xlu0 %v343
        %v348 = vpop.xlane.xlu0 %347
        %349 = vadd.xlane.f32.xlu0 %v344
        %v350 = vpop.xlane.xlu0 %349
        %351 = vadd.xlane.f32.xlu0 %v345
        %v352 = vpop.xlane.xlu0 %351
        %353 = vadd.xlane.f32.xlu0 %v346
        %v354 = vpop.xlane.xlu0 %353
        %v355 = vrcp.pop 128.0
        %v356 = vmul.f32 %v348, %v355
        %v357 = vmul.f32 %v350, %v355
        %v358 = vmul.f32 %v352, %v355
        %v359 = vmul.f32 %v354, %v355
        %v360 = vmul.f32 %v343, %v343
        %v361 = vmul.f32 %v344, %v344
        %v362 = vmul.f32 %v345, %v345
        %v363 = vmul.f32 %v346, %v346
        %364 = vadd.xlane.f32.xlu0 %v360
        %v365 = vpop.xlane.xlu0 %364
        %366 = vadd.xlane.f32.xlu0 %v361
        %v367 = vpop.xlane.xlu0 %366
        %368 = vadd.xlane.f32.xlu0 %v362
        %v369 = vpop.xlane.xlu0 %368
        %370 = vadd.xlane.f32.xlu0 %v363
        %v371 = vpop.xlane.xlu0 %370
        %v372 = vmul.f32 %v365, %v355
        %v373 = vmul.f32 %v367, %v355
        %v374 = vmul.f32 %v369, %v355
        %v375 = vmul.f32 %v371, %v355
        %v376 = vmul.f32 %v356, %v356
        %v377 = vmul.f32 %v357, %v357
        %v378 = vmul.f32 %v358, %v358
        %v379 = vmul.f32 %v359, %v359
        %v380 = vsub.f32 %v372, %v376
        %v381 = vsub.f32 %v373, %v377
        %v382 = vsub.f32 %v374, %v378
        %v383 = vsub.f32 %v375, %v379
        %v384 = vmax.f32 %v380, 0.0
        %v385 = vmax.f32 %v381, 0.0
        %v386 = vmax.f32 %v382, 0.0
        %v387 = vmax.f32 %v383, 0.0
        %v388 = vadd.f32 %v384, 1e-05
        %v389 = vadd.f32 %v385, 1e-05
        %v390 = vadd.f32 %v386, 1e-05
        %v391 = vadd.f32 %v387, 1e-05
        %v392 = vrsqrt.pop %v388
        %v393 = vrsqrt.pop %v389
        %v394 = vrsqrt.pop %v390
        %v395 = vrsqrt.pop %v391
        %v396 = vsub.f32 %v343, %v356
        %v397 = vsub.f32 %v344, %v357
        %v398 = vsub.f32 %v345, %v358
        %v399 = vsub.f32 %v346, %v359
        %v400 = vmul.f32 %v396, %v392
        %v401 = vmul.f32 %v397, %v393
        %v402 = vmul.f32 %v398, %v394
        %v403 = vmul.f32 %v399, %v395
        %v404 = vld [vmem:[%s1] sm:$0x1]
        %v406 = vlaneseq
        %v407 = vshrl.u32 %v406, 7
        %v408 = vsub.s32 0, %v407
        %v409 = vrot.slane %v404, %v408
        %v411 = vmul.f32 %v400, %v409
        %v412 = vmul.f32 %v401, %v409
        %v413 = vmul.f32 %v402, %v409
        %v414 = vmul.f32 %v403, %v409
        %v415 = vld [vmem:[%s2] sm:$0x1]
        %v417 = vlaneseq
        %v418 = vshrl.u32 %v417, 7
        %v419 = vsub.s32 0, %v418
        %v420 = vrot.slane %v415, %v419
        %v422 = vadd.f32 %v411, %v420
        %v423 = vadd.f32 %v412, %v420
        %v424 = vadd.f32 %v413, %v420
        %v425 = vadd.f32 %v414, %v420
        %v426 = vpack.c.bf16 %v423, %v422
        %v427 = vpack.c.bf16 %v425, %v424
        %v428 = vld [vmem:[#allocation5] sm:$0xff]
        %v429 = vld [vmem:[#allocation5 + $0x8] sm:$0xff]
        %v430 = vld [vmem:[#allocation5 + $0x10] sm:$0xff]
        %v431 = vld [vmem:[#allocation5 + $0x18] sm:$0xff]
        %v432 = vld [vmem:[#allocation5 + $0x20] sm:$0xff]
        %v433 = vld [vmem:[#allocation5 + $0x28] sm:$0xff]
        %v434 = vld [vmem:[#allocation5 + $0x30] sm:$0xff]
        %v435 = vld [vmem:[#allocation5 + $0x38] sm:$0xff]
        %v436 = vld [vmem:[#allocation5 + $0x40] sm:$0xff]
        %v437 = vld [vmem:[#allocation5 + $0x48] sm:$0xff]
        %v438 = vld [vmem:[#allocation5 + $0x50] sm:$0xff]
        %v439 = vld [vmem:[#allocation5 + $0x58] sm:$0xff]
        %v440 = vld [vmem:[#allocation5 + $0x60] sm:$0xff]
        %v441 = vld [vmem:[#allocation5 + $0x68] sm:$0xff]
        %v442 = vld [vmem:[#allocation5 + $0x70] sm:$0xff]
        %v443 = vld [vmem:[#allocation5 + $0x78] sm:$0xff]
        %v444 = vld [vmem:[%s4] sm:$0x3]
        %v446 = vlaneseq
        %v447 = vshrl.u32 %v446, 7
        %v448 = vsub.s32 0, %v447
        %v449 = vrot.slane %v444, %v448
        %v450 = vlaneseq
        %v451 = vshrl.u32 %v450, 7
        %v452 = vsub.s32 1, %v451
        %v453 = vrot.slane %v444, %v452
        %v472 = vunpack.c.l.b16 %v428
        %v473 = vunpack.c.h.b16 %v428
        %v474 = vunpack.c.l.b16 %v429
        %v475 = vunpack.c.h.b16 %v429
        %v476 = vunpack.c.l.b16 %v430
        %v477 = vunpack.c.h.b16 %v430
        %v478 = vunpack.c.l.b16 %v431
        %v479 = vunpack.c.h.b16 %v431
        %v480 = vunpack.c.l.b16 %v432
        %v481 = vunpack.c.h.b16 %v432
        %v482 = vunpack.c.l.b16 %v433
        %v483 = vunpack.c.h.b16 %v433
        %v484 = vunpack.c.l.b16 %v434
        %v485 = vunpack.c.h.b16 %v434
        %v486 = vunpack.c.l.b16 %v435
        %v487 = vunpack.c.h.b16 %v435
        %v488 = vunpack.c.l.b16 %v436
        %v489 = vunpack.c.h.b16 %v436
        %v490 = vunpack.c.l.b16 %v437
        %v491 = vunpack.c.h.b16 %v437
        %v492 = vunpack.c.l.b16 %v438
        %v493 = vunpack.c.h.b16 %v438
        %v494 = vunpack.c.l.b16 %v439
        %v495 = vunpack.c.h.b16 %v439
        %v496 = vunpack.c.l.b16 %v440
        %v497 = vunpack.c.h.b16 %v440
        %v498 = vunpack.c.l.b16 %v441
        %v499 = vunpack.c.h.b16 %v441
        %v500 = vunpack.c.l.b16 %v442
        %v501 = vunpack.c.h.b16 %v442
        %v502 = vunpack.c.l.b16 %v443
        %v503 = vunpack.c.h.b16 %v443
        %v504 = vpack.c.b16 %v474, %v472
        %v505 = vpack.c.b16 %v475, %v473
        %v506 = vpack.c.b16 %v478, %v476
        %v507 = vpack.c.b16 %v479, %v477
        %v508 = vpack.c.b16 %v482, %v480
        %v509 = vpack.c.b16 %v483, %v481
        %v510 = vpack.c.b16 %v486, %v484
        %v511 = vpack.c.b16 %v487, %v485
        %v512 = vpack.c.b16 %v490, %v488
        %v513 = vpack.c.b16 %v491, %v489
        %v514 = vpack.c.b16 %v494, %v492
        %v515 = vpack.c.b16 %v495, %v493
        %v516 = vpack.c.b16 %v498, %v496
        %v517 = vpack.c.b16 %v499, %v497
        %v518 = vpack.c.b16 %v502, %v500
        %v519 = vpack.c.b16 %v503, %v501
        %536 = vmatprep.subr.bf16.mxu0 %v505
        %537 = vmatpush1.bf16.msra.mxu0 %v504
        %538 = vmatprep.subr.bf16.mxu0 %v507
        %539 = vmatpush1.bf16.msra.mxu0 %v506
        %540 = vmatprep.subr.bf16.mxu0 %v509
        %541 = vmatpush1.bf16.msra.mxu0 %v508
        %542 = vmatprep.subr.bf16.mxu0 %v511
        %543 = vmatpush1.bf16.msra.mxu0 %v510
        %544 = vmatprep.subr.bf16.mxu0 %v513
        %545 = vmatpush1.bf16.msra.mxu0 %v512
        %546 = vmatprep.subr.bf16.mxu0 %v515
        %547 = vmatpush1.bf16.msra.mxu0 %v514
        %548 = vmatprep.subr.bf16.mxu0 %v517
        %549 = vmatpush1.bf16.msra.mxu0 %v516
        %550 = vmatprep.subr.bf16.mxu0 %v519
        %551 = vmatpush1.bf16.msra.mxu0 %v518
        %552 = vmatprep.subr.bf16.mxu0 0
        %553 = vmatpush1.bf16.msra.mxu0 0
        %554 = vmatprep.subr.bf16.mxu0 0
        %555 = vmatpush1.bf16.msra.mxu0 0
        %556 = vmatprep.subr.bf16.mxu0 0
        %557 = vmatpush1.bf16.msra.mxu0 0
        %558 = vmatprep.subr.bf16.mxu0 0
        %559 = vmatpush1.bf16.msra.mxu0 0
        %560 = vmatprep.subr.bf16.mxu0 0
        %561 = vmatpush1.bf16.msra.mxu0 0
        %562 = vmatprep.subr.bf16.mxu0 0
        %563 = vmatpush1.bf16.msra.mxu0 0
        %564 = vmatprep.subr.bf16.mxu0 0
        %565 = vmatpush1.bf16.msra.mxu0 0
        %566 = vmatprep.subr.bf16.mxu0 0
        %567 = vmatpush1.bf16.msra.mxu0 0
        %568 = vmatprep.mubr.bf16.mxu0 0
        %569 = vmatmul.mubr.bf16.gmra.mrb[0].mxu0 %v426
        %v570 = vpop.f32.mrb[0].mxu0
        %v571 = vadd.f32 %v449, %v570
        %v572 = vpop.f32.mrb[0].mxu0
        %v573 = vadd.f32 %v453, %v572
        %v574 = vpop.f32.mrb[0].mxu0
        %v575 = vadd.f32 %v449, %v574
        %v576 = vpop.f32.mrb[0].mxu0
        %v577 = vadd.f32 %v453, %v576
        %578 = vmatprep.mubr.bf16.mxu0 0
        %579 = vmatmul.mubr.bf16.gmra.mrb[0].mxu0 %v427
        %v580 = vpop.f32.mrb[0].mxu0
        %v581 = vadd.f32 %v449, %v580
        %v582 = vpop.f32.mrb[0].mxu0
        %v583 = vadd.f32 %v453, %v582
        %v584 = vpop.f32.mrb[0].mxu0
        %v585 = vadd.f32 %v449, %v584
        %v586 = vpop.f32.mrb[0].mxu0
        %v587 = vadd.f32 %v453, %v586
        %588 = vdwg.mxu0
        %v589 = vmul.f32 %v571, %v571
        %v590 = vmul.f32 %v573, %v573
        %v591 = vmul.f32 %v575, %v575
        %v592 = vmul.f32 %v577, %v577
        %v593 = vmul.f32 %v581, %v581
        %v594 = vmul.f32 %v583, %v583
        %v595 = vmul.f32 %v585, %v585
        %v596 = vmul.f32 %v587, %v587
        %v597 = vmul.f32 %v571, %v589
        %v598 = vmul.f32 %v573, %v590
        %v599 = vmul.f32 %v575, %v591
        %v600 = vmul.f32 %v577, %v592
        %v601 = vmul.f32 %v581, %v593
        %v602 = vmul.f32 %v583, %v594
        %v603 = vmul.f32 %v585, %v595
        %v604 = vmul.f32 %v587, %v596
        %v605 = vmul.f32 %v597, 0.044715
        %v606 = vmul.f32 %v598, 0.044715
        %v607 = vmul.f32 %v599, 0.044715
        %v608 = vmul.f32 %v600, 0.044715
        %v609 = vmul.f32 %v601, 0.044715
        %v610 = vmul.f32 %v602, 0.044715
        %v611 = vmul.f32 %v603, 0.044715
        %v612 = vmul.f32 %v604, 0.044715
        %v613 = vadd.f32 %v571, %v605
        %v614 = vadd.f32 %v573, %v606
        %v615 = vadd.f32 %v575, %v607
        %v616 = vadd.f32 %v577, %v608
        %v617 = vadd.f32 %v581, %v609
        %v618 = vadd.f32 %v583, %v610
        %v619 = vadd.f32 %v585, %v611
        %v620 = vadd.f32 %v587, %v612
        %v621 = vmul.f32 %v613, 0.7978846
        %v622 = vmul.f32 %v614, 0.7978846
        %v623 = vmul.f32 %v615, 0.7978846
        %v624 = vmul.f32 %v616, 0.7978846
        %v625 = vmul.f32 %v617, 0.7978846
        %v626 = vmul.f32 %v618, 0.7978846
        %v627 = vmul.f32 %v619, 0.7978846
        %v628 = vmul.f32 %v620, 0.7978846
        %v629 = vtanh.pop %v621
        %v630 = vtanh.pop %v622
        %v631 = vtanh.pop %v623
        %v632 = vtanh.pop %v624
        %v633 = vtanh.pop %v625
        %v634 = vtanh.pop %v626
        %v635 = vtanh.pop %v627
        %v636 = vtanh.pop %v628
        %v637 = vadd.f32 %v629, 1.0
        %v638 = vadd.f32 %v630, 1.0
        %v639 = vadd.f32 %v631, 1.0
        %v640 = vadd.f32 %v632, 1.0
        %v641 = vadd.f32 %v633, 1.0
        %v642 = vadd.f32 %v634, 1.0
        %v643 = vadd.f32 %v635, 1.0
        %v644 = vadd.f32 %v636, 1.0
        %v645 = vmul.f32 %v637, 0.5
        %v646 = vmul.f32 %v638, 0.5
        %v647 = vmul.f32 %v639, 0.5
        %v648 = vmul.f32 %v640, 0.5
        %v649 = vmul.f32 %v641, 0.5
        %v650 = vmul.f32 %v642, 0.5
        %v651 = vmul.f32 %v643, 0.5
        %v652 = vmul.f32 %v644, 0.5
        %v653 = vmul.f32 %v571, %v645
        %v654 = vmul.f32 %v573, %v646
        %v655 = vmul.f32 %v575, %v647
        %v656 = vmul.f32 %v577, %v648
        %v657 = vmul.f32 %v581, %v649
        %v658 = vmul.f32 %v583, %v650
        %v659 = vmul.f32 %v585, %v651
        %v660 = vmul.f32 %v587, %v652
        %v661 = vpack.c.bf16 %v655, %v653
        %v662 = vpack.c.bf16 %v656, %v654
        %v663 = vpack.c.bf16 %v659, %v657
        %v664 = vpack.c.bf16 %v660, %v658
        %v665 = vld [vmem:[#allocation7] sm:$0xf]
        %v666 = vld [vmem:[#allocation7 + $0x4] sm:$0xf]
        %v667 = vld [vmem:[#allocation7 + $0x8] sm:$0xf]
        %v668 = vld [vmem:[#allocation7 + $0xc] sm:$0xf]
        %v669 = vld [vmem:[#allocation7 + $0x10] sm:$0xf]
        %v670 = vld [vmem:[#allocation7 + $0x14] sm:$0xf]
        %v671 = vld [vmem:[#allocation7 + $0x18] sm:$0xf]
        %v672 = vld [vmem:[#allocation7 + $0x1c] sm:$0xf]
        %v673 = vld [vmem:[#allocation7 + $0x20] sm:$0xf]
        %v674 = vld [vmem:[#allocation7 + $0x24] sm:$0xf]
        %v675 = vld [vmem:[#allocation7 + $0x28] sm:$0xf]
        %v676 = vld [vmem:[#allocation7 + $0x2c] sm:$0xf]
        %v677 = vld [vmem:[#allocation7 + $0x30] sm:$0xf]
        %v678 = vld [vmem:[#allocation7 + $0x34] sm:$0xf]
        %v679 = vld [vmem:[#allocation7 + $0x38] sm:$0xf]
        %v680 = vld [vmem:[#allocation7 + $0x3c] sm:$0xf]
        %v681 = vld [vmem:[#allocation7 + $0x40] sm:$0xf]
        %v682 = vld [vmem:[#allocation7 + $0x44] sm:$0xf]
        %v683 = vld [vmem:[#allocation7 + $0x48] sm:$0xf]
        %v684 = vld [vmem:[#allocation7 + $0x4c] sm:$0xf]
        %v685 = vld [vmem:[#allocation7 + $0x50] sm:$0xf]
        %v686 = vld [vmem:[#allocation7 + $0x54] sm:$0xf]
        %v687 = vld [vmem:[#allocation7 + $0x58] sm:$0xf]
        %v688 = vld [vmem:[#allocation7 + $0x5c] sm:$0xf]
        %v689 = vld [vmem:[#allocation7 + $0x60] sm:$0xf]
        %v690 = vld [vmem:[#allocation7 + $0x64] sm:$0xf]
        %v691 = vld [vmem:[#allocation7 + $0x68] sm:$0xf]
        %v692 = vld [vmem:[#allocation7 + $0x6c] sm:$0xf]
        %v693 = vld [vmem:[#allocation7 + $0x70] sm:$0xf]
        %v694 = vld [vmem:[#allocation7 + $0x74] sm:$0xf]
        %v695 = vld [vmem:[#allocation7 + $0x78] sm:$0xf]
        %v696 = vld [vmem:[#allocation7 + $0x7c] sm:$0xf]
        %v697 = vld [vmem:[%s6] sm:$0x1]
        %v699 = vlaneseq
        %v700 = vshrl.u32 %v699, 7
        %v701 = vsub.s32 0, %v700
        %v702 = vrot.slane %v697, %v701
        %v736 = vunpack.c.l.b16 %v665
        %v737 = vunpack.c.l.b16 %v666
        %v738 = vunpack.c.l.b16 %v667
        %v739 = vunpack.c.l.b16 %v668
        %v740 = vunpack.c.l.b16 %v669
        %v741 = vunpack.c.l.b16 %v670
        %v742 = vunpack.c.l.b16 %v671
        %v743 = vunpack.c.l.b16 %v672
        %v744 = vunpack.c.l.b16 %v673
        %v745 = vunpack.c.l.b16 %v674
        %v746 = vunpack.c.l.b16 %v675
        %v747 = vunpack.c.l.b16 %v676
        %v748 = vunpack.c.l.b16 %v677
        %v749 = vunpack.c.l.b16 %v678
        %v750 = vunpack.c.l.b16 %v679
        %v751 = vunpack.c.l.b16 %v680
        %v752 = vunpack.c.l.b16 %v681
        %v753 = vunpack.c.l.b16 %v682
        %v754 = vunpack.c.l.b16 %v683
        %v755 = vunpack.c.l.b16 %v684
        %v756 = vunpack.c.l.b16 %v685
        %v757 = vunpack.c.l.b16 %v686
        %v758 = vunpack.c.l.b16 %v687
        %v759 = vunpack.c.l.b16 %v688
        %v760 = vunpack.c.l.b16 %v689
        %v761 = vunpack.c.l.b16 %v690
        %v762 = vunpack.c.l.b16 %v691
        %v763 = vunpack.c.l.b16 %v692
        %v764 = vunpack.c.l.b16 %v693
        %v765 = vunpack.c.l.b16 %v694
        %v766 = vunpack.c.l.b16 %v695
        %v767 = vunpack.c.l.b16 %v696
        %v768 = vpack.c.b16 %v737, %v736
        %v769 = vpack.c.b16 %v739, %v738
        %v770 = vpack.c.b16 %v741, %v740
        %v771 = vpack.c.b16 %v743, %v742
        %v772 = vpack.c.b16 %v745, %v744
        %v773 = vpack.c.b16 %v747, %v746
        %v774 = vpack.c.b16 %v749, %v748
        %v775 = vpack.c.b16 %v751, %v750
        %v776 = vpack.c.b16 %v753, %v752
        %v777 = vpack.c.b16 %v755, %v754
        %v778 = vpack.c.b16 %v757, %v756
        %v779 = vpack.c.b16 %v759, %v758
        %v780 = vpack.c.b16 %v761, %v760
        %v781 = vpack.c.b16 %v763, %v762
        %v782 = vpack.c.b16 %v765, %v764
        %v783 = vpack.c.b16 %v767, %v766
        %800 = vmatprep.subr.bf16.mxu0 0
        %801 = vmatpush1.bf16.msra.mxu0 %v768
        %802 = vmatprep.subr.bf16.mxu0 0
        %803 = vmatpush1.bf16.msra.mxu0 %v769
        %804 = vmatprep.subr.bf16.mxu0 0
        %805 = vmatpush1.bf16.msra.mxu0 %v770
        %806 = vmatprep.subr.bf16.mxu0 0
        %807 = vmatpush1.bf16.msra.mxu0 %v771
        %808 = vmatprep.subr.bf16.mxu0 0
        %809 = vmatpush1.bf16.msra.mxu0 %v772
        %810 = vmatprep.subr.bf16.mxu0 0
        %811 = vmatpush1.bf16.msra.mxu0 %v773
        %812 = vmatprep.subr.bf16.mxu0 0
        %813 = vmatpush1.bf16.msra.mxu0 %v774
        %814 = vmatprep.subr.bf16.mxu0 0
        %815 = vmatpush1.bf16.msra.mxu0 %v775
        %816 = vmatprep.subr.bf16.mxu0 0
        %817 = vmatpush1.bf16.msra.mxu0 %v776
        %818 = vmatprep.subr.bf16.mxu0 0
        %819 = vmatpush1.bf16.msra.mxu0 %v777
        %820 = vmatprep.subr.bf16.mxu0 0
        %821 = vmatpush1.bf16.msra.mxu0 %v778
        %822 = vmatprep.subr.bf16.mxu0 0
        %823 = vmatpush1.bf16.msra.mxu0 %v779
        %824 = vmatprep.subr.bf16.mxu0 0
        %825 = vmatpush1.bf16.msra.mxu0 %v780
        %826 = vmatprep.subr.bf16.mxu0 0
        %827 = vmatpush1.bf16.msra.mxu0 %v781
        %828 = vmatprep.subr.bf16.mxu0 0
        %829 = vmatpush1.bf16.msra.mxu0 %v782
        %830 = vmatprep.subr.bf16.mxu0 0
        %831 = vmatpush1.bf16.msra.mxu0 %v783
        %832 = vmatprep.mubr.bf16.mxu0 %v662
        %833 = vmatmul.mubr.bf16.gmra.mrb[0].mxu0 %v661
        %v834 = vpop.f32.mrb[0].mxu0
        %v835 = vadd.f32 %v702, %v834
        %v836 = vpop.f32.mrb[0].mxu0
        %v837 = vpop.f32.mrb[0].mxu0
        %v838 = vadd.f32 %v702, %v837
        %v839 = vpop.f32.mrb[0].mxu0
        %840 = vmatprep.mubr.bf16.mxu0 %v664
        %841 = vmatmul.mubr.bf16.gmra.mrb[0].mxu0 %v663
        %v842 = vpop.f32.mrb[0].mxu0
        %v843 = vadd.f32 %v702, %v842
        %v844 = vpop.f32.mrb[0].mxu0
        %v845 = vpop.f32.mrb[0].mxu0
        %v846 = vadd.f32 %v702, %v845
        %v847 = vpop.f32.mrb[0].mxu0
        %848 = vdwg.mxu0
        %v849 = vadd.f32 %v835, %v343
        %v850 = vadd.f32 %v838, %v344
        %v851 = vadd.f32 %v843, %v345
        %v852 = vadd.f32 %v846, %v346
        %853 = vst [vmem:[%s331] sm:$0xff] %v849
        %854 = vst [vmem:[%s331 + $0x8] sm:$0xff] %v850
        %855 = vst [vmem:[%s331 + $0x10] sm:$0xff] %v851
        %856 = vst [vmem:[%s331 + $0x18] sm:$0xff] %v852
        %s857 = sand.u32 %s185, 1
        %s858 = scalar_lea.sflag [#allocation4], %s857
        %s859 = sand.u32 %s185, 1
        %s860 = smul.addr %s859, 32
        %s861 = scalar_lea.vmem [#allocation8], %s860
        // Predicated region
        $region61: #{tpu_custom_call.1} parent=47 // pred_check
          %p862 = pneg %p195
        $region62: #{tpu_custom_call.1} parent=47 // pred_check_branch
          %864 = sbr.rel (%p862) target = $region64
        $region63: #{tpu_custom_call.1} parent=47 // pred_region
          %s865 = smul.u32 4, %s25
          %s866 = ssub.s32 10, %s865
          %p867 = scmp.lt.s32.totalorder %s866, 4
          %s868 = scalar_select %p867, %s866, 4
          %s869 = smul.u32 128, %s868
          %s871 = ssub.s32 512, %s869
          %872 = vsyncadd %s858, %s871
          %p873 = scmp.ne.s32.totalorder 0, %s869
          %s874 = smul.addr %s865, 128
          %s875 = scalar_lea.hbm %s7, %s874
          %s876 = smul.u32 8, %s868
          %s877 = sshll.u32 %s861, 4
          %s878 = int_to_ptr.vmem [resolvable:$true] %s877
          %s879 = sshll.u32 %s876, 4
          %883 = dma.vmem_to_hbm [thread:$0]  (%p873), %s878, %s879, %s875, %s858, 128, 128, 8
        $region64: #{tpu_custom_call.1} parent=47 // pred_fallthru
          _
      $region48: #{tpu_custom_call.1} parent=5 // pred_fallthru
        _
      %p884 = scmp.le.s32.totalorder 2, %s20
      // Predicated region
      $region65: #{tpu_custom_call.1} parent=5 // pred_check
        %p885 = pneg %p884
      $region66: #{tpu_custom_call.1} parent=5 // pred_check_branch
        %887 = sbr.rel (%p885) target = $region68
      $region67: #{tpu_custom_call.1} parent=5 // pred_region
        %s888 = ssub.s32 %s20, 2
        // Predicated region
        $region69: #{tpu_custom_call.1} parent=67 // pred_check
          %p889 = pneg %p201
        $region70: #{tpu_custom_call.1} parent=67 // pred_check_branch
          %891 = sbr.rel (%p889) target = $region72
        $region71: #{tpu_custom_call.1} parent=67 // pred_region
          %s892 = sand.u32 %s186, 1
          %s893 = scalar_lea.sflag [#allocation4], %s892
          %s894 = sand.u32 %s186, 1
          %s895 = smul.addr %s894, 32
          %s896 = scalar_lea.vmem [#allocation8], %s895
          %897 = dma.done %s893, 512
        $region72: #{tpu_custom_call.1} parent=67 // pred_fallthru
          _
      $region68: #{tpu_custom_call.1} parent=5 // pred_fallthru
        _
    $region6: #{tpu_custom_call.1} parent=1 // loop_footer
      %s24 = sadd.s32 1, %s20
    $region7: #{tpu_custom_call.1} parent=1 // loop_footer_branch
      %19 = sbr.rel target = $region3
    $region8: #{tpu_custom_call.1} parent=1 // loop_exit
      _
    %898 = vsyncpa [#allocation3], 1
    %s899 = scalar_lea.sflag [#allocation3], 1
    %900 = vsyncpa %s899, 1
    %901 = vsyncpa [#allocation6], 1
    %902 = vsyncpa [#allocation4], 1
    %s903 = scalar_lea.sflag [#allocation4], 1
    %904 = vsyncpa %s903, 1

// kernel: tpu_custom_call.1
$region0: #{tpu_custom_call.1}
  #allocation0 [shape = 'u32[]', space=smem, size = 0x4, offset = 0x4, fixed_abs, tag = 'smem constant byte address 0x4 - core index']
  #allocation1 [shape = 'u32[144,128]{1,0:T(1,128)}', space=vmem, size = 0x12000, scoped, tag = 'internal scratch']
  %s0 = inlined_call_operand.hbm [shape: f32[80,128], index: 0, kind: input, shape index: {}]
  %s1 = inlined_call_operand.vmem [shape: f32[1,128], index: 1, kind: input, shape index: {}]
  %s2 = inlined_call_operand.vmem [shape: f32[1,128], index: 2, kind: input, shape index: {}]
  %s3 = inlined_call_operand.hbm [shape: bf16[128,256], index: 3, kind: input, shape index: {}]
  %s4 = inlined_call_operand.vmem [shape: f32[1,256], index: 4, kind: input, shape index: {}]
  %s5 = inlined_call_operand.hbm [shape: bf16[256,128], index: 5, kind: input, shape index: {}]
  %s6 = inlined_call_operand.vmem [shape: f32[1,128], index: 6, kind: input, shape index: {}]
  %s7 = inlined_call_operand.hbm [shape: f32[80,128], index: 7, kind: output, shape index: {}]
  %s8 = sld [smem:[#allocation0]]
  $region73: #{tpu_custom_call.1} parent=0
    _
  %s10 = ssub.s32 1, %s8
  %s11 = scalar_select 0, %s10, %s8
  $region1: #{tpu_custom_call.1} parent=0
    #allocation2 [shape = 'u8[32768]{0}', space=vmem, size = 0x8000, scoped, tag = 'input window, operand 0']
    #allocation3 [shape = 's32[2]{0}', space=sflag, size = 0x8, scoped, tag = 'scoped memory for tpu_custom_call.1']
    #allocation4 [shape = 's32[2]{0}', space=sflag, size = 0x8, scoped, tag = 'scoped memory for tpu_custom_call.1']
    #allocation5 [shape = 'u8[65536]{0}', space=vmem, size = 0x10000, scoped, tag = 'input window, operand 3, single buffered']
    #allocation6 [shape = 's32[1]{0}', space=sflag, size = 0x4, scoped, tag = 'scoped memory for tpu_custom_call.1']
    #allocation7 [shape = 'u8[65536]{0}', space=vmem, size = 0x10000, scoped, tag = 'input window, operand 5, single buffered']
    #allocation8 [shape = 'u8[32768]{0}', space=vmem, size = 0x8000, scoped, tag = 'output window, operand 0']
    %12 = vsyncpa [#allocation3], 0
    %s13 = scalar_lea.sflag [#allocation3], 1
    %14 = vsyncpa %s13, 0
    %15 = vsyncpa [#allocation6], 0
    %16 = vsyncpa [#allocation4], 0
    %s17 = scalar_lea.sflag [#allocation4], 1
    %18 = vsyncpa %s17, 0
    loop: start=0, step=1, limit=5
    $region2: #{tpu_custom_call.1} parent=1 // loop_pre_header
      _
    $region3: #{tpu_custom_call.1} parent=1 // loop_header
      %s20 = sphi 0, %s24
      %p21 = scmp.ge.s32.totalorder %s20, 5
      %s30 = sphi 0, %s32
      %s33 = sphi 0, %s30
      %s34 = sphi 0, %s33
      %s50 = sphi 0, %s34
      %s54 = sphi 0, %s54
      %s56 = sphi 0, %s54
      %s57 = sphi 0, %s56
      %s71 = sphi 0, %s57
      %s75 = sphi 0, %s75
      %s77 = sphi 0, %s75
      %s78 = sphi 0, %s77
      %s92 = sphi 0, %s78
      %s96 = sphi 0, %s96
      %s98 = sphi 0, %s96
      %s99 = sphi 0, %s98
      %s113 = sphi 0, %s99
      %s117 = sphi 0, %s117
      %s119 = sphi 0, %s117
      %s120 = sphi 0, %s119
      %s134 = sphi 0, %s120
      %s138 = sphi 0, %s138
      %s140 = sphi 0, %s138
      %s141 = sphi 0, %s140
      %s155 = sphi 0, %s141
      %s159 = sphi 0, %s159
      %s161 = sphi 0, %s159
      %s162 = sphi 0, %s161
      %s176 = sphi 0, %s162
      %s182 = sphi 0, %s184
      %s185 = sphi 0, %s182
      %s186 = sphi 0, %s185
      %s202 = sphi 0, %s186
    $region4: #{tpu_custom_call.1} parent=1 // loop_header_branch
      %23 = sbr.rel (%p21) target = $region8
    $region5: #{tpu_custom_call.1} parent=1 // loop_body
      %s25 = ssub.s32 %s20, 1
      %s26 = ssub.s32 %s20, 2
      %s27 = sadd.s32 %s20, 1
      %s28 = ssub.s32 %s20, %s27
      %p29 = scmp.eq.s32.totalorder %s28, 0
      %s31 = sadd.s32 %s30, 1
      %s32 = scalar_select %p29, %s30, %s31
      %p35 = pneg %p29
      %p36 = scmp.eq.s32.totalorder %s20, 2
      %p37 = por %p35, %p36
      %p38 = scmp.ne.s32.totalorder %s30, %s33
      %p39 = scmp.eq.s32.totalorder %s20, 0
      %p40 = por %p38, %p39
      %p41 = scmp.ne.s32.totalorder %s30, %s33
      %p42 = scmp.eq.s32.totalorder %s25, 2
      %p43 = por %p41, %p42
      %p44 = scmp.ne.s32.totalorder %s33, %s34
      %p45 = scmp.eq.s32.totalorder %s25, 0
      %p46 = por %p44, %p45
      %p47 = scmp.ne.s32.totalorder %s33, %s34
      %p48 = scmp.eq.s32.totalorder %s26, 2
      %p49 = por %p47, %p48
      %p51 = scmp.ne.s32.totalorder %s34, %s50
      %p52 = scmp.eq.s32.totalorder %s26, 0
      %p53 = por %p51, %p52
      %s55 = sadd.s32 %s54, 1
      %p58 = scmp.eq.s32.totalorder %s20, 2
      %p59 = scmp.ne.s32.totalorder %s54, %s56
      %p60 = scmp.eq.s32.totalorder %s20, 0
      %p61 = por %p59, %p60
      %p62 = scmp.ne.s32.totalorder %s54, %s56
      %p63 = scmp.eq.s32.totalorder %s25, 2
      %p64 = por %p62, %p63
      %p65 = scmp.ne.s32.totalorder %s56, %s57
      %p66 = scmp.eq.s32.totalorder %s25, 0
      %p67 = por %p65, %p66
      %p68 = scmp.ne.s32.totalorder %s56, %s57
      %p69 = scmp.eq.s32.totalorder %s26, 2
      %p70 = por %p68, %p69
      %p72 = scmp.ne.s32.totalorder %s57, %s71
      %p73 = scmp.eq.s32.totalorder %s26, 0
      %p74 = por %p72, %p73
      %s76 = sadd.s32 %s75, 1
      %p79 = scmp.eq.s32.totalorder %s20, 2
      %p80 = scmp.ne.s32.totalorder %s75, %s77
      %p81 = scmp.eq.s32.totalorder %s20, 0
      %p82 = por %p80, %p81
      %p83 = scmp.ne.s32.totalorder %s75, %s77
      %p84 = scmp.eq.s32.totalorder %s25, 2
      %p85 = por %p83, %p84
      %p86 = scmp.ne.s32.totalorder %s77, %s78
      %p87 = scmp.eq.s32.totalorder %s25, 0
      %p88 = por %p86, %p87
      %p89 = scmp.ne.s32.totalorder %s77, %s78
      %p90 = scmp.eq.s32.totalorder %s26, 2
      %p91 = por %p89, %p90
      %p93 = scmp.ne.s32.totalorder %s78, %s92
      %p94 = scmp.eq.s32.totalorder %s26, 0
      %p95 = por %p93, %p94
      %s97 = sadd.s32 %s96, 1
      %p100 = scmp.eq.s32.totalorder %s20, 2
      %p101 = scmp.ne.s32.totalorder %s96, %s98
      %p102 = scmp.eq.s32.totalorder %s20, 0
      %p103 = por %p101, %p102
      %p104 = scmp.ne.s32.totalorder %s96, %s98
      %p105 = scmp.eq.s32.totalorder %s25, 2
      %p106 = por %p104, %p105
      %p107 = scmp.ne.s32.totalorder %s98, %s99
      %p108 = scmp.eq.s32.totalorder %s25, 0
      %p109 = por %p107, %p108
      %p110 = scmp.ne.s32.totalorder %s98, %s99
      %p111 = scmp.eq.s32.totalorder %s26, 2
      %p112 = por %p110, %p111
      %p114 = scmp.ne.s32.totalorder %s99, %s113
      %p115 = scmp.eq.s32.totalorder %s26, 0
      %p116 = por %p114, %p115
      %s118 = sadd.s32 %s117, 1
      %p121 = scmp.eq.s32.totalorder %s20, 2
      %p122 = scmp.ne.s32.totalorder %s117, %s119
      %p123 = scmp.eq.s32.totalorder %s20, 0
      %p124 = por %p122, %p123
      %p125 = scmp.ne.s32.totalorder %s117, %s119
      %p126 = scmp.eq.s32.totalorder %s25, 2
      %p127 = por %p125, %p126
      %p128 = scmp.ne.s32.totalorder %s119, %s120
      %p129 = scmp.eq.s32.totalorder %s25, 0
      %p130 = por %p128, %p129
      %p131 = scmp.ne.s32.totalorder %s119, %s120
      %p132 = scmp.eq.s32.totalorder %s26, 2
      %p133 = por %p131, %p132
      %p135 = scmp.ne.s32.totalorder %s120, %s134
      %p136 = scmp.eq.s32.totalorder %s26, 0
      %p137 = por %p135, %p136
      %s139 = sadd.s32 %s138, 1
      %p142 = scmp.eq.s32.totalorder %s20, 2
      %p143 = scmp.ne.s32.totalorder %s138, %s140
      %p144 = scmp.eq.s32.totalorder %s20, 0
      %p145 = por %p143, %p144
      %p146 = scmp.ne.s32.totalorder %s138, %s140
      %p147 = scmp.eq.s32.totalorder %s25, 2
      %p148 = por %p146, %p147
      %p149 = scmp.ne.s32.totalorder %s140, %s141
      %p150 = scmp.eq.s32.totalorder %s25, 0
      %p151 = por %p149, %p150
      %p152 = scmp.ne.s32.totalorder %s140, %s141
      %p153 = scmp.eq.s32.totalorder %s26, 2
      %p154 = por %p152, %p153
      %p156 = scmp.ne.s32.totalorder %s141, %s155
      %p157 = scmp.eq.s32.totalorder %s26, 0
      %p158 = por %p156, %p157
      %s160 = sadd.s32 %s159, 1
      %p163 = scmp.eq.s32.totalorder %s20, 2
      %p164 = scmp.ne.s32.totalorder %s159, %s161
      %p165 = scmp.eq.s32.totalorder %s20, 0
      %p166 = por %p164, %p165
      %p167 = scmp.ne.s32.totalorder %s159, %s161
      %p168 = scmp.eq.s32.totalorder %s25, 2
      %p169 = por %p167, %p168
      %p170 = scmp.ne.s32.totalorder %s161, %s162
      %p171 = scmp.eq.s32.totalorder %s25, 0
      %p172 = por %p170, %p171
      %p173 = scmp.ne.s32.totalorder %s161, %s162
      %p174 = scmp.eq.s32.totalorder %s26, 2
      %p175 = por %p173, %p174
      %p177 = scmp.ne.s32.totalorder %s162, %s176
      %p178 = scmp.eq.s32.totalorder %s26, 0
      %p179 = por %p177, %p178
      %s180 = ssub.s32 %s20, %s27
      %p181 = scmp.eq.s32.totalorder %s180, 0
      %s183 = sadd.s32 %s182, 1
      %s184 = scalar_select %p181, %s182, %s183
      %p187 = pneg %p181
      %p188 = scmp.eq.s32.totalorder %s20, 2
      %p189 = por %p187, %p188
      %p190 = scmp.ne.s32.totalorder %s182, %s185
      %p191 = scmp.eq.s32.totalorder %s20, 0
      %p192 = por %p190, %p191
      %p193 = scmp.ne.s32.totalorder %s182, %s185
      %p194 = scmp.eq.s32.totalorder %s25, 2
      %p195 = por %p193, %p194
      %p196 = scmp.ne.s32.totalorder %s185, %s186
      %p197 = scmp.eq.s32.totalorder %s25, 0
      %p198 = por %p196, %p197
      %p199 = scmp.ne.s32.totalorder %s185, %s186
      %p200 = scmp.eq.s32.totalorder %s26, 2
      %p201 = por %p199, %p200
      %p203 = scmp.ne.s32.totalorder %s186, %s202
      %p204 = scmp.eq.s32.totalorder %s26, 0
      %p205 = por %p203, %p204
      %p206 = scmp.le.s32.totalorder 1, %s20
      %p207 = scmp.lt.s32.totalorder %s20, 4
      %p208 = pnand %p206, %p207
      %p209 = pneg %p208
      // Predicated region
      $region9: #{tpu_custom_call.1} parent=5 // pred_check
        _
      $region10: #{tpu_custom_call.1} parent=5 // pred_check_branch
        %211 = sbr.rel (%p208) target = $region12
      $region11: #{tpu_custom_call.1} parent=5 // pred_region
        %s212 = ssub.s32 %s20, 1
        // Predicated region
        $region13: #{tpu_custom_call.1} parent=11 // pred_check
          %p213 = pneg %p67
        $region14: #{tpu_custom_call.1} parent=11 // pred_check_branch
          %215 = sbr.rel (%p213) target = $region16
        $region15: #{tpu_custom_call.1} parent=11 // pred_region
          _
        $region16: #{tpu_custom_call.1} parent=11 // pred_fallthru
          _
        // Predicated region
        $region17: #{tpu_custom_call.1} parent=11 // pred_check
          %p216 = pneg %p88
        $region18: #{tpu_custom_call.1} parent=11 // pred_check_branch
          %218 = sbr.rel (%p216) target = $region20
        $region19: #{tpu_custom_call.1} parent=11 // pred_region
          _
        $region20: #{tpu_custom_call.1} parent=11 // pred_fallthru
          _
        // Predicated region
        $region21: #{tpu_custom_call.1} parent=11 // pred_check
          %p219 = pneg %p109
        $region22: #{tpu_custom_call.1} parent=11 // pred_check_branch
          %221 = sbr.rel (%p219) target = $region24
        $region23: #{tpu_custom_call.1} parent=11 // pred_region
          %s223 = ssub.s32 2048, 2048
          %224 = vsyncadd [#allocation6], %s223
          %s225 = sshll.u32 [#allocation5], 4
          %s226 = int_to_ptr.vmem [resolvable:$true] %s225
          %231 = dma.hbm_to_vmem [thread:$0]  %s3, 2048, %s226, [#allocation6], 128, 128, 8
        $region24: #{tpu_custom_call.1} parent=11 // pred_fallthru
          _
        // Predicated region
        $region25: #{tpu_custom_call.1} parent=11 // pred_check
          %p232 = pneg %p130
        $region26: #{tpu_custom_call.1} parent=11 // pred_check_branch
          %234 = sbr.rel (%p232) target = $region28
        $region27: #{tpu_custom_call.1} parent=11 // pred_region
          _
        $region28: #{tpu_custom_call.1} parent=11 // pred_fallthru
          _
        // Predicated region
        $region29: #{tpu_custom_call.1} parent=11 // pred_check
          %p235 = pneg %p151
        $region30: #{tpu_custom_call.1} parent=11 // pred_check_branch
          %237 = sbr.rel (%p235) target = $region32
        $region31: #{tpu_custom_call.1} parent=11 // pred_region
          %s239 = ssub.s32 2048, 2048
          %240 = vsyncadd [#allocation6], %s239
          %s241 = sshll.u32 [#allocation7], 4
          %s242 = int_to_ptr.vmem [resolvable:$true] %s241
          %247 = dma.hbm_to_vmem [thread:$0]  %s5, 2048, %s242, [#allocation6], 64, 64, 4
        $region32: #{tpu_custom_call.1} parent=11 // pred_fallthru
          _
        // Predicated region
        $region33: #{tpu_custom_call.1} parent=11 // pred_check
          %p248 = pneg %p172
        $region34: #{tpu_custom_call.1} parent=11 // pred_check_branch
          %250 = sbr.rel (%p248) target = $region36
        $region35: #{tpu_custom_call.1} parent=11 // pred_region
          _
        $region36: #{tpu_custom_call.1} parent=11 // pred_fallthru
          _
      $region12: #{tpu_custom_call.1} parent=5 // pred_fallthru
        _
      %p251 = scmp.lt.s32.totalorder %s20, 3
      // Predicated region
      $region37: #{tpu_custom_call.1} parent=5 // pred_check
        %p252 = pneg %p251
      $region38: #{tpu_custom_call.1} parent=5 // pred_check_branch
        %254 = sbr.rel (%p252) target = $region40
      $region39: #{tpu_custom_call.1} parent=5 // pred_region
        // Predicated region
        $region41: #{tpu_custom_call.1} parent=39 // pred_check
          %p255 = pneg %p40
        $region42: #{tpu_custom_call.1} parent=39 // pred_check_branch
          %257 = sbr.rel (%p255) target = $region44
        $region43: #{tpu_custom_call.1} parent=39 // pred_region
          %s258 = sand.u32 %s30, 1
          %s259 = scalar_lea.sflag [#allocation3], %s258
          %s260 = sand.u32 %s30, 1
          %s261 = smul.addr %s260, 32
          %s262 = scalar_lea.vmem [#allocation2], %s261
          %s263 = smul.u32 4, %s20
          %s264 = ssub.s32 10, %s263
          %p265 = scmp.lt.s32.totalorder %s264, 4
          %s266 = scalar_select %p265, %s264, 4
          %s267 = smul.u32 128, %s266
          %s269 = ssub.s32 512, %s267
          %270 = vsyncadd %s259, %s269
          %p271 = scmp.ne.s32.totalorder 0, %s267
          %s272 = smul.addr %s263, 128
          %s273 = scalar_lea.hbm %s0, %s272
          %s274 = smul.u32 8, %s266
          %s275 = sshll.u32 %s262, 4
          %s276 = int_to_ptr.vmem [resolvable:$true] %s275
          %s277 = sshll.u32 %s274, 4
          %281 = dma.hbm_to_vmem [thread:$0]  (%p271), %s273, %s277, %s276, %s259, 128, 128, 8
        $region44: #{tpu_custom_call.1} parent=39 // pred_fallthru
          _
      $region40: #{tpu_custom_call.1} parent=5 // pred_fallthru
        _
      %p282 = scmp.le.s32.totalorder 1, %s20
      %p283 = scmp.lt.s32.totalorder %s20, 4
      %p284 = pnand %p282, %p283
      %p285 = pneg %p284
      // Predicated region
      $region45: #{tpu_custom_call.1} parent=5 // pred_check
        _
      $region46: #{tpu_custom_call.1} parent=5 // pred_check_branch
        %287 = sbr.rel (%p284) target = $region48
      $region47: #{tpu_custom_call.1} parent=5 // pred_region
        %s288 = ssub.s32 %s20, 1
        %s289 = sand.u32 %s33, 1
        %s290 = scalar_lea.sflag [#allocation3], %s289
        %s291 = sand.u32 %s33, 1
        %s292 = smul.addr %s291, 32
        %s293 = scalar_lea.vmem [#allocation2], %s292
        // Predicated region
        $region49: #{tpu_custom_call.1} parent=47 // pred_check
          %p294 = pneg %p46
        $region50: #{tpu_custom_call.1} parent=47 // pred_check_branch
          %296 = sbr.rel (%p294) target = $region52
        $region51: #{tpu_custom_call.1} parent=47 // pred_region
          %297 = dma.done %s290, 512
        $region52: #{tpu_custom_call.1} parent=47 // pred_fallthru
          _
        // Predicated region
        $region53: #{tpu_custom_call.1} parent=47 // pred_check
          %p298 = pneg %p109
        $region54: #{tpu_custom_call.1} parent=47 // pred_check_branch
          %300 = sbr.rel (%p298) target = $region56
        $region55: #{tpu_custom_call.1} parent=47 // pred_region
          %301 = dma.done [#allocation6], 2048
        $region56: #{tpu_custom_call.1} parent=47 // pred_fallthru
          _
        // Predicated region
        $region57: #{tpu_custom_call.1} parent=47 // pred_check
          %p302 = pneg %p151
        $region58: #{tpu_custom_call.1} parent=47 // pred_check_branch
          %304 = sbr.rel (%p302) target = $region60
        $region59: #{tpu_custom_call.1} parent=47 // pred_region
          %305 = dma.done [#allocation6], 2048
        $region60: #{tpu_custom_call.1} parent=47 // pred_fallthru
          _
        %s306 = sand.u32 %s33, 1
        %s307 = scalar_lea.sflag [#allocation3], %s306
        %s308 = sand.u32 %s33, 1
        %s309 = smul.addr %s308, 32
        %s310 = scalar_lea.vmem [#allocation2], %s309
        %p311 = pneg %p46
        %p312 = pneg %p43
        %p313 = pneg %p67
        %p314 = pneg %p64
        %p315 = pneg %p88
        %p316 = pneg %p85
        %p317 = pneg %p109
        %p318 = pneg %p106
        %p319 = pneg %p130
        %p320 = pneg %p127
        %p321 = pneg %p151
        %p322 = pneg %p148
        %p323 = pneg %p172
        %p324 = pneg %p169
        %p325 = pneg %p198
        %p326 = pneg %p195
        %s327 = sand.u32 %s185, 1
        %s328 = scalar_lea.sflag [#allocation4], %s327
        %s329 = sand.u32 %s185, 1
        %s330 = smul.addr %s329, 32
        %s331 = scalar_lea.vmem [#allocation8], %s330
        %s332 = smul.u32 4, %s25
        %s333 = ssub.s32 10, %s332
        %p334 = scmp.lt.s32.totalorder %s333, 4
        %s335 = scalar_select %p334, %s333, 4
        %s336 = smul.u32 128, %s335
        %s337 = smul.u32 4, %s25
        %s338 = ssub.s32 10, %s337
        %p339 = scmp.lt.s32.totalorder %s338, 4
        %s340 = scalar_select %p339, %s338, 4
        %s341 = smul.u32 128, %s340
        %v343 = vld [vmem:[%s293] sm:$0xff]
        %v344 = vld [vmem:[%s293 + $0x8] sm:$0xff]
        %v345 = vld [vmem:[%s293 + $0x10] sm:$0xff]
        %v346 = vld [vmem:[%s293 + $0x18] sm:$0xff]
        %347 = vadd.xlane.f32.xlu0 %v343
        %v348 = vpop.xlane.xlu0 %347
        %349 = vadd.xlane.f32.xlu0 %v344
        %v350 = vpop.xlane.xlu0 %349
        %351 = vadd.xlane.f32.xlu0 %v345
        %v352 = vpop.xlane.xlu0 %351
        %353 = vadd.xlane.f32.xlu0 %v346
        %v354 = vpop.xlane.xlu0 %353
        %v355 = vrcp.pop 128.0
        %v356 = vmul.f32 %v348, %v355
        %v357 = vmul.f32 %v350, %v355
        %v358 = vmul.f32 %v352, %v355
        %v359 = vmul.f32 %v354, %v355
        %v360 = vmul.f32 %v343, %v343
        %v361 = vmul.f32 %v344, %v344
        %v362 = vmul.f32 %v345, %v345
        %v363 = vmul.f32 %v346, %v346
        %364 = vadd.xlane.f32.xlu0 %v360
        %v365 = vpop.xlane.xlu0 %364
        %366 = vadd.xlane.f32.xlu0 %v361
        %v367 = vpop.xlane.xlu0 %366
        %368 = vadd.xlane.f32.xlu0 %v362
        %v369 = vpop.xlane.xlu0 %368
        %370 = vadd.xlane.f32.xlu0 %v363
        %v371 = vpop.xlane.xlu0 %370
        %v372 = vmul.f32 %v365, %v355
        %v373 = vmul.f32 %v367, %v355
        %v374 = vmul.f32 %v369, %v355
        %v375 = vmul.f32 %v371, %v355
        %v376 = vmul.f32 %v356, %v356
        %v377 = vmul.f32 %v357, %v357
        %v378 = vmul.f32 %v358, %v358
        %v379 = vmul.f32 %v359, %v359
        %v380 = vsub.f32 %v372, %v376
        %v381 = vsub.f32 %v373, %v377
        %v382 = vsub.f32 %v374, %v378
        %v383 = vsub.f32 %v375, %v379
        %v384 = vmax.f32 %v380, 0.0
        %v385 = vmax.f32 %v381, 0.0
        %v386 = vmax.f32 %v382, 0.0
        %v387 = vmax.f32 %v383, 0.0
        %v388 = vadd.f32 %v384, 1e-05
        %v389 = vadd.f32 %v385, 1e-05
        %v390 = vadd.f32 %v386, 1e-05
        %v391 = vadd.f32 %v387, 1e-05
        %v392 = vrsqrt.pop %v388
        %v393 = vrsqrt.pop %v389
        %v394 = vrsqrt.pop %v390
        %v395 = vrsqrt.pop %v391
        %v396 = vsub.f32 %v343, %v356
        %v397 = vsub.f32 %v344, %v357
        %v398 = vsub.f32 %v345, %v358
        %v399 = vsub.f32 %v346, %v359
        %v400 = vmul.f32 %v396, %v392
        %v401 = vmul.f32 %v397, %v393
        %v402 = vmul.f32 %v398, %v394
        %v403 = vmul.f32 %v399, %v395
        %v404 = vld [vmem:[%s1] sm:$0x1]
        %v406 = vlaneseq
        %v407 = vshrl.u32 %v406, 7
        %v408 = vsub.s32 0, %v407
        %v409 = vrot.slane %v404, %v408
        %v411 = vmul.f32 %v400, %v409
        %v412 = vmul.f32 %v401, %v409
        %v413 = vmul.f32 %v402, %v409
        %v414 = vmul.f32 %v403, %v409
        %v415 = vld [vmem:[%s2] sm:$0x1]
        %v417 = vlaneseq
        %v418 = vshrl.u32 %v417, 7
        %v419 = vsub.s32 0, %v418
        %v420 = vrot.slane %v415, %v419
        %v422 = vadd.f32 %v411, %v420
        %v423 = vadd.f32 %v412, %v420
        %v424 = vadd.f32 %v413, %v420
        %v425 = vadd.f32 %v414, %v420
        %v426 = vpack.c.bf16 %v423, %v422
        %v427 = vpack.c.bf16 %v425, %v424
        %v428 = vld [vmem:[#allocation5] sm:$0xff]
        %v429 = vld [vmem:[#allocation5 + $0x8] sm:$0xff]
        %v430 = vld [vmem:[#allocation5 + $0x10] sm:$0xff]
        %v431 = vld [vmem:[#allocation5 + $0x18] sm:$0xff]
        %v432 = vld [vmem:[#allocation5 + $0x20] sm:$0xff]
        %v433 = vld [vmem:[#allocation5 + $0x28] sm:$0xff]
        %v434 = vld [vmem:[#allocation5 + $0x30] sm:$0xff]
        %v435 = vld [vmem:[#allocation5 + $0x38] sm:$0xff]
        %v436 = vld [vmem:[#allocation5 + $0x40] sm:$0xff]
        %v437 = vld [vmem:[#allocation5 + $0x48] sm:$0xff]
        %v438 = vld [vmem:[#allocation5 + $0x50] sm:$0xff]
        %v439 = vld [vmem:[#allocation5 + $0x58] sm:$0xff]
        %v440 = vld [vmem:[#allocation5 + $0x60] sm:$0xff]
        %v441 = vld [vmem:[#allocation5 + $0x68] sm:$0xff]
        %v442 = vld [vmem:[#allocation5 + $0x70] sm:$0xff]
        %v443 = vld [vmem:[#allocation5 + $0x78] sm:$0xff]
        %v444 = vld [vmem:[%s4] sm:$0x3]
        %v446 = vlaneseq
        %v447 = vshrl.u32 %v446, 7
        %v448 = vsub.s32 0, %v447
        %v449 = vrot.slane %v444, %v448
        %v450 = vlaneseq
        %v451 = vshrl.u32 %v450, 7
        %v452 = vsub.s32 1, %v451
        %v453 = vrot.slane %v444, %v452
        %v472 = vunpack.c.l.b16 %v428
        %v473 = vunpack.c.h.b16 %v428
        %v474 = vunpack.c.l.b16 %v429
        %v475 = vunpack.c.h.b16 %v429
        %v476 = vunpack.c.l.b16 %v430
        %v477 = vunpack.c.h.b16 %v430
        %v478 = vunpack.c.l.b16 %v431
        %v479 = vunpack.c.h.b16 %v431
        %v480 = vunpack.c.l.b16 %v432
        %v481 = vunpack.c.h.b16 %v432
        %v482 = vunpack.c.l.b16 %v433
        %v483 = vunpack.c.h.b16 %v433
        %v484 = vunpack.c.l.b16 %v434
        %v485 = vunpack.c.h.b16 %v434
        %v486 = vunpack.c.l.b16 %v435
        %v487 = vunpack.c.h.b16 %v435
        %v488 = vunpack.c.l.b16 %v436
        %v489 = vunpack.c.h.b16 %v436
        %v490 = vunpack.c.l.b16 %v437
        %v491 = vunpack.c.h.b16 %v437
        %v492 = vunpack.c.l.b16 %v438
        %v493 = vunpack.c.h.b16 %v438
        %v494 = vunpack.c.l.b16 %v439
        %v495 = vunpack.c.h.b16 %v439
        %v496 = vunpack.c.l.b16 %v440
        %v497 = vunpack.c.h.b16 %v440
        %v498 = vunpack.c.l.b16 %v441
        %v499 = vunpack.c.h.b16 %v441
        %v500 = vunpack.c.l.b16 %v442
        %v501 = vunpack.c.h.b16 %v442
        %v502 = vunpack.c.l.b16 %v443
        %v503 = vunpack.c.h.b16 %v443
        %v504 = vpack.c.b16 %v474, %v472
        %v505 = vpack.c.b16 %v475, %v473
        %v506 = vpack.c.b16 %v478, %v476
        %v507 = vpack.c.b16 %v479, %v477
        %v508 = vpack.c.b16 %v482, %v480
        %v509 = vpack.c.b16 %v483, %v481
        %v510 = vpack.c.b16 %v486, %v484
        %v511 = vpack.c.b16 %v487, %v485
        %v512 = vpack.c.b16 %v490, %v488
        %v513 = vpack.c.b16 %v491, %v489
        %v514 = vpack.c.b16 %v494, %v492
        %v515 = vpack.c.b16 %v495, %v493
        %v516 = vpack.c.b16 %v498, %v496
        %v517 = vpack.c.b16 %v499, %v497
        %v518 = vpack.c.b16 %v502, %v500
        %v519 = vpack.c.b16 %v503, %v501
        %536 = vmatprep.subr.bf16.mxu0 %v505
        %537 = vmatpush1.bf16.msra.mxu0 %v504
        %538 = vmatprep.subr.bf16.mxu0 %v507
        %539 = vmatpush1.bf16.msra.mxu0 %v506
        %540 = vmatprep.subr.bf16.mxu0 %v509
        %541 = vmatpush1.bf16.msra.mxu0 %v508
        %542 = vmatprep.subr.bf16.mxu0 %v511
        %543 = vmatpush1.bf16.msra.mxu0 %v510
        %544 = vmatprep.subr.bf16.mxu0 %v513
        %545 = vmatpush1.bf16.msra.mxu0 %v512
        %546 = vmatprep.subr.bf16.mxu0 %v515
        %547 = vmatpush1.bf16.msra.mxu0 %v514
        %548 = vmatprep.subr.bf16.mxu0 %v517
        %549 = vmatpush1.bf16.msra.mxu0 %v516
        %550 = vmatprep.subr.bf16.mxu0 %v519
        %551 = vmatpush1.bf16.msra.mxu0 %v518
        %552 = vmatprep.subr.bf16.mxu0 0
        %553 = vmatpush1.bf16.msra.mxu0 0
        %554 = vmatprep.subr.bf16.mxu0 0
        %555 = vmatpush1.bf16.msra.mxu0 0
        %556 = vmatprep.subr.bf16.mxu0 0
        %557 = vmatpush1.bf16.msra.mxu0 0
        %558 = vmatprep.subr.bf16.mxu0 0
        %559 = vmatpush1.bf16.msra.mxu0 0
        %560 = vmatprep.subr.bf16.mxu0 0
        %561 = vmatpush1.bf16.msra.mxu0 0
        %562 = vmatprep.subr.bf16.mxu0 0
        %563 = vmatpush1.bf16.msra.mxu0 0
        %564 = vmatprep.subr.bf16.mxu0 0
        %565 = vmatpush1.bf16.msra.mxu0 0
        %566 = vmatprep.subr.bf16.mxu0 0
        %567 = vmatpush1.bf16.msra.mxu0 0
        %568 = vmatprep.mubr.bf16.mxu0 0
        %569 = vmatmul.mubr.bf16.gmra.mrb[0].mxu0 %v426
        %v570 = vpop.f32.mrb[0].mxu0
        %v571 = vadd.f32 %v449, %v570
        %v572 = vpop.f32.mrb[0].mxu0
        %v573 = vadd.f32 %v453, %v572
        %v574 = vpop.f32.mrb[0].mxu0
        %v575 = vadd.f32 %v449, %v574
        %v576 = vpop.f32.mrb[0].mxu0
        %v577 = vadd.f32 %v453, %v576
        %578 = vmatprep.mubr.bf16.mxu0 0
        %579 = vmatmul.mubr.bf16.gmra.mrb[0].mxu0 %v427
        %v580 = vpop.f32.mrb[0].mxu0
        %v581 = vadd.f32 %v449, %v580
        %v582 = vpop.f32.mrb[0].mxu0
        %v583 = vadd.f32 %v453, %v582
        %v584 = vpop.f32.mrb[0].mxu0
        %v585 = vadd.f32 %v449, %v584
        %v586 = vpop.f32.mrb[0].mxu0
        %v587 = vadd.f32 %v453, %v586
        %588 = vdwg.mxu0
        %v589 = vmul.f32 %v571, %v571
        %v590 = vmul.f32 %v573, %v573
        %v591 = vmul.f32 %v575, %v575
        %v592 = vmul.f32 %v577, %v577
        %v593 = vmul.f32 %v581, %v581
        %v594 = vmul.f32 %v583, %v583
        %v595 = vmul.f32 %v585, %v585
        %v596 = vmul.f32 %v587, %v587
        %v597 = vmul.f32 %v571, %v589
        %v598 = vmul.f32 %v573, %v590
        %v599 = vmul.f32 %v575, %v591
        %v600 = vmul.f32 %v577, %v592
        %v601 = vmul.f32 %v581, %v593
        %v602 = vmul.f32 %v583, %v594
        %v603 = vmul.f32 %v585, %v595
        %v604 = vmul.f32 %v587, %v596
        %v605 = vmul.f32 %v597, 0.044715
        %v606 = vmul.f32 %v598, 0.044715
        %v607 = vmul.f32 %v599, 0.044715
        %v608 = vmul.f32 %v600, 0.044715
        %v609 = vmul.f32 %v601, 0.044715
        %v610 = vmul.f32 %v602, 0.044715
        %v611 = vmul.f32 %v603, 0.044715
        %v612 = vmul.f32 %v604, 0.044715
        %v613 = vadd.f32 %v571, %v605
        %v614 = vadd.f32 %v573, %v606
        %v615 = vadd.f32 %v575, %v607
        %v616 = vadd.f32 %v577, %v608
        %v617 = vadd.f32 %v581, %v609
        %v618 = vadd.f32 %v583, %v610
        %v619 = vadd.f32 %v585, %v611
        %v620 = vadd.f32 %v587, %v612
        %v621 = vmul.f32 %v613, 0.7978846
        %v622 = vmul.f32 %v614, 0.7978846
        %v623 = vmul.f32 %v615, 0.7978846
        %v624 = vmul.f32 %v616, 0.7978846
        %v625 = vmul.f32 %v617, 0.7978846
        %v626 = vmul.f32 %v618, 0.7978846
        %v627 = vmul.f32 %v619, 0.7978846
        %v628 = vmul.f32 %v620, 0.7978846
        %v629 = vtanh.pop %v621
        %v630 = vtanh.pop %v622
        %v631 = vtanh.pop %v623
        %v632 = vtanh.pop %v624
        %v633 = vtanh.pop %v625
        %v634 = vtanh.pop %v626
        %v635 = vtanh.pop %v627
        %v636 = vtanh.pop %v628
        %v637 = vadd.f32 %v629, 1.0
        %v638 = vadd.f32 %v630, 1.0
        %v639 = vadd.f32 %v631, 1.0
        %v640 = vadd.f32 %v632, 1.0
        %v641 = vadd.f32 %v633, 1.0
        %v642 = vadd.f32 %v634, 1.0
        %v643 = vadd.f32 %v635, 1.0
        %v644 = vadd.f32 %v636, 1.0
        %v645 = vmul.f32 %v637, 0.5
        %v646 = vmul.f32 %v638, 0.5
        %v647 = vmul.f32 %v639, 0.5
        %v648 = vmul.f32 %v640, 0.5
        %v649 = vmul.f32 %v641, 0.5
        %v650 = vmul.f32 %v642, 0.5
        %v651 = vmul.f32 %v643, 0.5
        %v652 = vmul.f32 %v644, 0.5
        %v653 = vmul.f32 %v571, %v645
        %v654 = vmul.f32 %v573, %v646
        %v655 = vmul.f32 %v575, %v647
        %v656 = vmul.f32 %v577, %v648
        %v657 = vmul.f32 %v581, %v649
        %v658 = vmul.f32 %v583, %v650
        %v659 = vmul.f32 %v585, %v651
        %v660 = vmul.f32 %v587, %v652
        %v661 = vpack.c.bf16 %v655, %v653
        %v662 = vpack.c.bf16 %v656, %v654
        %v663 = vpack.c.bf16 %v659, %v657
        %v664 = vpack.c.bf16 %v660, %v658
        %v665 = vld [vmem:[#allocation7] sm:$0xf]
        %v666 = vld [vmem:[#allocation7 + $0x4] sm:$0xf]
        %v667 = vld [vmem:[#allocation7 + $0x8] sm:$0xf]
        %v668 = vld [vmem:[#allocation7 + $0xc] sm:$0xf]
        %v669 = vld [vmem:[#allocation7 + $0x10] sm:$0xf]
        %v670 = vld [vmem:[#allocation7 + $0x14] sm:$0xf]
        %v671 = vld [vmem:[#allocation7 + $0x18] sm:$0xf]
        %v672 = vld [vmem:[#allocation7 + $0x1c] sm:$0xf]
        %v673 = vld [vmem:[#allocation7 + $0x20] sm:$0xf]
        %v674 = vld [vmem:[#allocation7 + $0x24] sm:$0xf]
        %v675 = vld [vmem:[#allocation7 + $0x28] sm:$0xf]
        %v676 = vld [vmem:[#allocation7 + $0x2c] sm:$0xf]
        %v677 = vld [vmem:[#allocation7 + $0x30] sm:$0xf]
        %v678 = vld [vmem:[#allocation7 + $0x34] sm:$0xf]
        %v679 = vld [vmem:[#allocation7 + $0x38] sm:$0xf]
        %v680 = vld [vmem:[#allocation7 + $0x3c] sm:$0xf]
        %v681 = vld [vmem:[#allocation7 + $0x40] sm:$0xf]
        %v682 = vld [vmem:[#allocation7 + $0x44] sm:$0xf]
        %v683 = vld [vmem:[#allocation7 + $0x48] sm:$0xf]
        %v684 = vld [vmem:[#allocation7 + $0x4c] sm:$0xf]
        %v685 = vld [vmem:[#allocation7 + $0x50] sm:$0xf]
        %v686 = vld [vmem:[#allocation7 + $0x54] sm:$0xf]
        %v687 = vld [vmem:[#allocation7 + $0x58] sm:$0xf]
        %v688 = vld [vmem:[#allocation7 + $0x5c] sm:$0xf]
        %v689 = vld [vmem:[#allocation7 + $0x60] sm:$0xf]
        %v690 = vld [vmem:[#allocation7 + $0x64] sm:$0xf]
        %v691 = vld [vmem:[#allocation7 + $0x68] sm:$0xf]
        %v692 = vld [vmem:[#allocation7 + $0x6c] sm:$0xf]
        %v693 = vld [vmem:[#allocation7 + $0x70] sm:$0xf]
        %v694 = vld [vmem:[#allocation7 + $0x74] sm:$0xf]
        %v695 = vld [vmem:[#allocation7 + $0x78] sm:$0xf]
        %v696 = vld [vmem:[#allocation7 + $0x7c] sm:$0xf]
        %v697 = vld [vmem:[%s6] sm:$0x1]
        %v699 = vlaneseq
        %v700 = vshrl.u32 %v699, 7
        %v701 = vsub.s32 0, %v700
        %v702 = vrot.slane %v697, %v701
        %v736 = vunpack.c.l.b16 %v665
        %v737 = vunpack.c.l.b16 %v666
        %v738 = vunpack.c.l.b16 %v667
        %v739 = vunpack.c.l.b16 %v668
        %v740 = vunpack.c.l.b16 %v669
        %v741 = vunpack.c.l.b16 %v670
        %v742 = vunpack.c.l.b16 %v671
        %v743 = vunpack.c.l.b16 %v672
        %v744 = vunpack.c.l.b16 %v673
        %v745 = vunpack.c.l.b16 %v674
        %v746 = vunpack.c.l.b16 %v675
        %v747 = vunpack.c.l.b16 %v676
        %v748 = vunpack.c.l.b16 %v677
        %v749 = vunpack.c.l.b16 %v678
        %v750 = vunpack.c.l.b16 %v679
        %v751 = vunpack.c.l.b16 %v680
        %v752 = vunpack.c.l.b16 %v681
        %v753 = vunpack.c.l.b16 %v682
        %v754 = vunpack.c.l.b16 %v683
        %v755 = vunpack.c.l.b16 %v684
        %v756 = vunpack.c.l.b16 %v685
        %v757 = vunpack.c.l.b16 %v686
        %v758 = vunpack.c.l.b16 %v687
        %v759 = vunpack.c.l.b16 %v688
        %v760 = vunpack.c.l.b16 %v689
        %v761 = vunpack.c.l.b16 %v690
        %v762 = vunpack.c.l.b16 %v691
        %v763 = vunpack.c.l.b16 %v692
        %v764 = vunpack.c.l.b16 %v693
        %v765 = vunpack.c.l.b16 %v694
        %v766 = vunpack.c.l.b16 %v695
        %v767 = vunpack.c.l.b16 %v696
        %v768 = vpack.c.b16 %v737, %v736
        %v769 = vpack.c.b16 %v739, %v738
        %v770 = vpack.c.b16 %v741, %v740
        %v771 = vpack.c.b16 %v743, %v742
        %v772 = vpack.c.b16 %v745, %v744
        %v773 = vpack.c.b16 %v747, %v746
        %v774 = vpack.c.b16 %v749, %v748
        %v775 = vpack.c.b16 %v751, %v750
        %v776 = vpack.c.b16 %v753, %v752
        %v777 = vpack.c.b16 %v755, %v754
        %v778 = vpack.c.b16 %v757, %v756
        %v779 = vpack.c.b16 %v759, %v758
        %v780 = vpack.c.b16 %v761, %v760
        %v781 = vpack.c.b16 %v763, %v762
        %v782 = vpack.c.b16 %v765, %v764
        %v783 = vpack.c.b16 %v767, %v766
        %800 = vmatprep.subr.bf16.mxu0 0
        %801 = vmatpush1.bf16.msra.mxu0 %v768
        %802 = vmatprep.subr.bf16.mxu0 0
        %803 = vmatpush1.bf16.msra.mxu0 %v769
        %804 = vmatprep.subr.bf16.mxu0 0
        %805 = vmatpush1.bf16.msra.mxu0 %v770
        %806 = vmatprep.subr.bf16.mxu0 0
        %807 = vmatpush1.bf16.msra.mxu0 %v771
        %808 = vmatprep.subr.bf16.mxu0 0
        %809 = vmatpush1.bf16.msra.mxu0 %v772
        %810 = vmatprep.subr.bf16.mxu0 0
        %811 = vmatpush1.bf16.msra.mxu0 %v773
        %812 = vmatprep.subr.bf16.mxu0 0
        %813 = vmatpush1.bf16.msra.mxu0 %v774
        %814 = vmatprep.subr.bf16.mxu0 0
        %815 = vmatpush1.bf16.msra.mxu0 %v775
        %816 = vmatprep.subr.bf16.mxu0 0
        %817 = vmatpush1.bf16.msra.mxu0 %v776
        %818 = vmatprep.subr.bf16.mxu0 0
        %819 = vmatpush1.bf16.msra.mxu0 %v777
        %820 = vmatprep.subr.bf16.mxu0 0
        %821 = vmatpush1.bf16.msra.mxu0 %v778
        %822 = vmatprep.subr.bf16.mxu0 0
        %823 = vmatpush1.bf16.msra.mxu0 %v779
        %824 = vmatprep.subr.bf16.mxu0 0
        %825 = vmatpush1.bf16.msra.mxu0 %v780
        %826 = vmatprep.subr.bf16.mxu0 0
        %827 = vmatpush1.bf16.msra.mxu0 %v781
        %828 = vmatprep.subr.bf16.mxu0 0
        %829 = vmatpush1.bf16.msra.mxu0 %v782
        %830 = vmatprep.subr.bf16.mxu0 0
        %831 = vmatpush1.bf16.msra.mxu0 %v783
        %832 = vmatprep.mubr.bf16.mxu0 %v662
        %833 = vmatmul.mubr.bf16.gmra.mrb[0].mxu0 %v661
        %v834 = vpop.f32.mrb[0].mxu0
        %v835 = vadd.f32 %v702, %v834
        %v836 = vpop.f32.mrb[0].mxu0
        %v837 = vpop.f32.mrb[0].mxu0
        %v838 = vadd.f32 %v702, %v837
        %v839 = vpop.f32.mrb[0].mxu0
        %840 = vmatprep.mubr.bf16.mxu0 %v664
        %841 = vmatmul.mubr.bf16.gmra.mrb[0].mxu0 %v663
        %v842 = vpop.f32.mrb[0].mxu0
        %v843 = vadd.f32 %v702, %v842
        %v844 = vpop.f32.mrb[0].mxu0
        %v845 = vpop.f32.mrb[0].mxu0
        %v846 = vadd.f32 %v702, %v845
        %v847 = vpop.f32.mrb[0].mxu0
        %848 = vdwg.mxu0
        %v849 = vadd.f32 %v835, %v343
        %v850 = vadd.f32 %v838, %v344
        %v851 = vadd.f32 %v843, %v345
        %v852 = vadd.f32 %v846, %v346
        %853 = vst [vmem:[%s331] sm:$0xff] %v849
        %854 = vst [vmem:[%s331 + $0x8] sm:$0xff] %v850
        %855 = vst [vmem:[%s331 + $0x10] sm:$0xff] %v851
        %856 = vst [vmem:[%s331 + $0x18] sm:$0xff] %v852
        %s857 = sand.u32 %s185, 1
        %s858 = scalar_lea.sflag [#allocation4], %s857
        %s859 = sand.u32 %s185, 1
        %s860 = smul.addr %s859, 32
        %s861 = scalar_lea.vmem [#allocation8], %s860
        // Predicated region
        $region61: #{tpu_custom_call.1} parent=47 // pred_check
          %p862 = pneg %p195
        $region62: #{tpu_custom_call.1} parent=47 // pred_check_branch
          %864 = sbr.rel (%p862) target = $region64
        $region63: #{tpu_custom_call.1} parent=47 // pred_region
          %s865 = smul.u32 4, %s25
          %s866 = ssub.s32 10, %s865
          %p867 = scmp.lt.s32.totalorder %s866, 4
          %s868 = scalar_select %p867, %s866, 4
          %s869 = smul.u32 128, %s868
          %s871 = ssub.s32 512, %s869
          %872 = vsyncadd %s858, %s871
          %p873 = scmp.ne.s32.totalorder 0, %s869
          %s874 = smul.addr %s865, 128
          %s875 = scalar_lea.hbm %s7, %s874
          %s876 = smul.u32 8, %s868
          %s877 = sshll.u32 %s861, 4
          %s878 = int_to_ptr.vmem [resolvable:$true] %s877
          %s879 = sshll.u32 %s876, 4
          %883 = dma.vmem_to_hbm [thread:$0]  (%p873), %s878, %s879, %s875, %s858, 128, 128, 8
        $region64: #{tpu_custom_call.1} parent=47 // pred_fallthru
          _
      $region48: #{tpu_custom_call.1} parent=5 // pred_fallthru
        _
      %p884 = scmp.le.s32.totalorder 2, %s20
      // Predicated region
      $region65: #{tpu_custom_call.1} parent=5 // pred_check
        %p885 = pneg %p884
      $region66: #{tpu_custom_call.1} parent=5 // pred_check_branch
        %887 = sbr.rel (%p885) target = $region68
      $region67: #{tpu_custom_call.1} parent=5 // pred_region
        %s888 = ssub.s32 %s20, 2
        // Predicated region
        $region69: #{tpu_custom_call.1} parent=67 // pred_check
          %p889 = pneg %p201
        $region70: #{tpu_custom_call.1} parent=67 // pred_check_branch
          %891 = sbr.rel (%p889) target = $region72
        $region71: #{tpu_custom_call.1} parent=67 // pred_region
          %s892 = sand.u32 %s186, 1
          %s893 = scalar_lea.sflag [#allocation4], %s892
          %s894 = sand.u32 %s186, 1
          %s895 = smul.addr %s894, 32
          %s896 = scalar_lea.vmem [#allocation8], %s895
          %897 = dma.done %s893, 512
        $region72: #{tpu_custom_call.1} parent=67 // pred_fallthru
          _
      $region68: #{tpu_custom_call.1} parent=5 // pred_fallthru
        _
    $region6: #{tpu_custom_call.1} parent=1 // loop_footer
      %s24 = sadd.s32 1, %s20
    $region7: #{tpu_custom_call.1} parent=1 // loop_footer_branch
      %19 = sbr.rel target = $region3
    $region8: #{tpu_custom_call.1} parent=1 // loop_exit
      _
    %898 = vsyncpa [#allocation3], 1
    %s899 = scalar_lea.sflag [#allocation3], 1
    %900 = vsyncpa %s899, 1
    %901 = vsyncpa [#allocation6], 1
    %902 = vsyncpa [#allocation4], 1
    %s903 = scalar_lea.sflag [#allocation4], 1
    %904 = vsyncpa %s903, 1

</llo_original>
